<compile_context>
chip_gen: v6e
topology: v6e:2x2x1
jax: 0.10.0
libtpu: 0.0.40
codegen_flags: <defaults>
</compile_context>

<pallas_src>
import functools
import math

import jax
import jax.numpy as jnp
from jax.experimental import pallas as pl
from jax.experimental.pallas import tpu as pltpu


def _gelu_exact(x):
    # Exact GELU: 0.5 * x * (1 + erf(x / sqrt(2)))  (torch nn.GELU default).
    return 0.5 * x * (1.0 + jax.lax.erf(x * (1.0 / math.sqrt(2.0))))


def _gelu_tanh(x):
    # tanh-approximate GELU; the tanh goes to the EUP slot (overlaps VPU/MXU).
    c = math.sqrt(2.0 / math.pi)
    return 0.5 * x * (1.0 + jnp.tanh(c * (x + 0.044715 * x * x * x)))


def _round_up(n, m):
    return ((n + m - 1) // m) * m


def _pad2d(a, rows, cols):
    r, c = a.shape
    if r == rows and c == cols:
        return a
    return jnp.pad(a, ((0, rows - r), (0, cols - c)))


def mlp_encoder_kernel(x_ref, w1_ref, b1_ref, w2_ref, b2_ref, o_ref, *, approximate):
    gelu = _gelu_tanh if approximate else _gelu_exact
    # Feed the MXU in the (pre-cast) weight dtype; accumulate in f32.
    x = x_ref[...].astype(w1_ref.dtype)
    h = jnp.dot(x, w1_ref[...], preferred_element_type=jnp.float32) + b1_ref[...]
    h = gelu(h)                                # f32 elementwise (VPU / EUP)
    h = h.astype(w2_ref.dtype)
    y = jnp.dot(h, w2_ref[...], preferred_element_type=jnp.float32) + b2_ref[...]
    o_ref[...] = gelu(y).astype(o_ref.dtype)


def prepare_mlp_encoder_params(w1, b1, w2, b2, *, precise=False):
    """Pad/cast the parameters ONCE (init time), not on every forward call.

    w1: [in_f, hid], b1: [hid] or [1, hid], w2: [hid, lat], b2: [lat] or [1, lat].
    Fast path (default): weights cast to bf16 (MXU feed), biases f32.
    precise=True: f32 weight feed + exact erf GELU (strict parity mode).
    """
    if b1.ndim == 1:
        b1 = b1.reshape(1, -1)
    if b2.ndim == 1:
        b2 = b2.reshape(1, -1)

    in_f, hid = w1.shape
    lat = w2.shape[1]
    hid_p = _round_up(hid, 128)
    lat_p = _round_up(lat, 128)   # lane-dense output (no masked partial stores)

    wdtype = jnp.float32 if precise else jnp.bfloat16
    return {
        "w1": _pad2d(w1, in_f, hid_p).astype(wdtype),
        "b1": _pad2d(b1, 1, hid_p).astype(jnp.float32),
        "w2": _pad2d(w2, hid_p, lat_p).astype(wdtype),
        "b2": _pad2d(b2, 1, lat_p).astype(jnp.float32),
        "lat": lat,
        "precise": precise,
    }


def mlp_encoder(x, params, *, block_b=None):
    """x: [B, in_f] f32; params: output of prepare_mlp_encoder_params."""
    B, in_f = x.shape
    w1_p, b1_p = params["w1"], params["b1"]
    w2_p, b2_p = params["w2"], params["b2"]
    lat = params["lat"]
    assert w1_p.shape[0] == in_f, (w1_p.shape, in_f)
    hid_p = w1_p.shape[1]
    lat_p = w2_p.shape[1]
    out_dtype = x.dtype

    # Batch tile: single grid step up to 512 rows (no serial-loop overhead on
    # v5e/v6e; h + GELU temps + double-buffered x/out tiles fit v5e's 16 MiB
    # and v7x's 32 MiB default scoped VMEM); larger batches tile at 512.
    if block_b is None:
        block_b = min(_round_up(B, 128), 512)
    B_p = _round_up(B, block_b)
    x_p = _pad2d(x, B_p, in_f)    # no-op (no copy) when B % block_b == 0

    grid = (B_p // block_b,)

    cost = pl.CostEstimate(
        flops=2 * B_p * (in_f * hid_p + hid_p * lat_p),
        transcendentals=0 if params["precise"] else B_p * (hid_p + lat_p),
        bytes_accessed=(x_p.size * x_p.dtype.itemsize
                        + w1_p.size * w1_p.dtype.itemsize
                        + w2_p.size * w2_p.dtype.itemsize
                        + b1_p.size * 4 + b2_p.size * 4
                        + B_p * lat_p * jnp.dtype(out_dtype).itemsize),
    )

    kernel = functools.partial(mlp_encoder_kernel,
                               approximate=not params["precise"])

    y_full = pl.pallas_call(
        kernel,
        out_shape=jax.ShapeDtypeStruct((B_p, lat_p), out_dtype),
        grid_spec=pltpu.PrefetchScalarGridSpec(
            num_scalar_prefetch=0,
            grid=grid,
            in_specs=[
                # x tile: full (unpadded) contraction dim, pipelined over batch.
                pl.BlockSpec((block_b, in_f), lambda i: (i, 0)),
                # Weights / biases: constant index maps -> VMEM-resident.
                pl.BlockSpec((in_f, hid_p), lambda i: (0, 0)),
                pl.BlockSpec((1, hid_p), lambda i: (0, 0)),
                pl.BlockSpec((hid_p, lat_p), lambda i: (0, 0)),
                pl.BlockSpec((1, lat_p), lambda i: (0, 0)),
            ],
            out_specs=pl.BlockSpec((block_b, lat_p), lambda i: (i, 0)),
        ),
        compiler_params=pltpu.CompilerParams(
            dimension_semantics=("parallel",),
        ),
        cost_estimate=cost,
    )(x_p, w1_p, b1_p, w2_p, b2_p)

    # Slice batch/lane padding back off (kernel output itself is lane-dense).
    return y_full[:B, :lat]


def _reference(x, w1, b1, w2, b2):
    hp = jax.lax.Precision.HIGHEST
    h = _gelu_exact(jnp.dot(x.astype(jnp.float32), w1, precision=hp) + b1)
    y = _gelu_exact(jnp.dot(h, w2, precision=hp) + b2)
    return y.astype(x.dtype)


if __name__ == "__main__":
    # Module-consistent shapes (in_features=64, hidden=1024, latent=50), small batch.
    B, in_f, hid, lat = 128, 64, 1024, 50

    key = jax.random.PRNGKey(0)
    kx, kw1, kb1, kw2, kb2 = jax.random.split(key, 5)

    x = jax.random.normal(kx, (B, in_f), dtype=jnp.float32)

    # Deterministic synthetic params (nn.Linear weight is [out, in]; we store
    # the transposed [in, out] layout the kernel consumes).
    bound1 = 1.0 / math.sqrt(in_f)
    w1 = jax.random.uniform(kw1, (in_f, hid), jnp.float32, -bound1, bound1)
    b1 = jax.random.uniform(kb1, (1, hid), jnp.float32, -bound1, bound1)
    bound2 = 1.0 / math.sqrt(hid)
    w2 = jax.random.uniform(kw2, (hid, lat), jnp.float32, -bound2, bound2)
    b2 = jax.random.uniform(kb2, (1, lat), jnp.float32, -bound2, bound2)

    ref = _reference(x, w1, b1, w2, b2)

    # Default fast path: bf16 MXU feed + EUP-routed tanh GELU (approximate).
    params_fast = prepare_mlp_encoder_params(w1, b1, w2, b2)           # init-time
    out = jax.block_until_ready(mlp_encoder(x, params_fast))
    assert out.shape == (B, lat), out.shape
    assert jnp.allclose(out, ref, atol=8e-2, rtol=8e-2), "fast path mismatch"

    # Strict-parity path: f32 weight feed + exact erf GELU.
    # (Not bit-exact vs a true f32 GEMM -- the MXU runs f32 as multi-pass bf16.)
    params_exact = prepare_mlp_encoder_params(w1, b1, w2, b2, precise=True)
    out_exact = jax.block_until_ready(mlp_encoder(x, params_exact))
    assert out_exact.shape == (B, lat), out_exact.shape
    assert jnp.allclose(out_exact, ref, atol=1e-4, rtol=1e-4), "exact path mismatch"

    print("KERNEL_OK")
</pallas_src>

<mosaic_0001>
module attributes {stable_mosaic.version = 11 : i64} {
  func.func @mlp_encoder_kernel(%arg0: i32, %arg1: memref<128x64xf32, #tpu.memory_space<vmem>>, %arg2: memref<64x1024xbf16, #tpu.memory_space<vmem>>, %arg3: memref<1x1024xf32, #tpu.memory_space<vmem>>, %arg4: memref<1024x128xbf16, #tpu.memory_space<vmem>>, %arg5: memref<1x128xf32, #tpu.memory_space<vmem>>, %arg6: memref<128x128xf32, #tpu.memory_space<vmem>>) attributes {dimension_semantics = [#tpu.dimension_semantics<parallel>], iteration_bounds = array<i64: 1>, scalar_prefetch = 0 : i64, scratch_operands = 0 : i64, tpu.core_type = #tpu.core_type<tc>, window_params = [{transform_indices = @transform_0, window_bounds = array<i64: 128, 64>}, {pipeline_mode = #tpu.pipeline_mode<synchronous>, transform_indices = @transform_1, window_bounds = array<i64: 64, 1024>}, {pipeline_mode = #tpu.pipeline_mode<synchronous>, transform_indices = @transform_2, window_bounds = array<i64: 1, 1024>}, {pipeline_mode = #tpu.pipeline_mode<synchronous>, transform_indices = @transform_3, window_bounds = array<i64: 1024, 128>}, {pipeline_mode = #tpu.pipeline_mode<synchronous>, transform_indices = @transform_4, window_bounds = array<i64: 1, 128>}, {transform_indices = @transform_5, window_bounds = array<i64: 128, 128>}]} {
    %c0 = arith.constant 0 : index
    %c0_0 = arith.constant 0 : index
    %0 = vector.load %arg1[%c0, %c0_0] : memref<128x64xf32, #tpu.memory_space<vmem>>, vector<128x64xf32>
    %1 = arith.truncf %0 : vector<128x64xf32> to vector<128x64xbf16>
    %c0_1 = arith.constant 0 : index
    %c0_2 = arith.constant 0 : index
    %2 = vector.load %arg2[%c0_1, %c0_2] : memref<64x1024xbf16, #tpu.memory_space<vmem>>, vector<64x1024xbf16>
    %cst = arith.constant dense<0.000000e+00> : vector<128x1024xf32>
    %3 = tpu.matmul %1, %2, %cst {dimension_numbers = #tpu.dot_dimension_numbers<[1], [0], [0], [1], [0, 0, 1, 1], [], []>} : vector<128x64xbf16>, vector<64x1024xbf16>, vector<128x1024xf32> -> vector<128x1024xf32>
    %c0_3 = arith.constant 0 : index
    %c0_4 = arith.constant 0 : index
    %4 = vector.load %arg3[%c0_3, %c0_4] : memref<1x1024xf32, #tpu.memory_space<vmem>>, vector<1x1024xf32>
    %5 = vector.broadcast %4 : vector<1x1024xf32> to vector<128x1024xf32>
    %6 = arith.addf %3, %5 : vector<128x1024xf32>
    %cst_5 = arith.constant 5.000000e-01 : f32
    %7 = vector.broadcast %cst_5 : f32 to vector<128x1024xf32>
    %8 = arith.mulf %7, %6 : vector<128x1024xf32>
    %cst_6 = arith.constant 4.471500e-02 : f32
    %9 = vector.broadcast %cst_6 : f32 to vector<128x1024xf32>
    %10 = arith.mulf %9, %6 : vector<128x1024xf32>
    %11 = arith.mulf %10, %6 : vector<128x1024xf32>
    %12 = arith.mulf %11, %6 : vector<128x1024xf32>
    %13 = arith.addf %6, %12 : vector<128x1024xf32>
    %cst_7 = arith.constant 0.797884583 : f32
    %14 = vector.broadcast %cst_7 : f32 to vector<128x1024xf32>
    %15 = arith.mulf %14, %13 : vector<128x1024xf32>
    %16 = math.tanh %15 : vector<128x1024xf32>
    %cst_8 = arith.constant 1.000000e+00 : f32
    %17 = vector.broadcast %cst_8 : f32 to vector<128x1024xf32>
    %18 = arith.addf %17, %16 : vector<128x1024xf32>
    %19 = arith.mulf %8, %18 : vector<128x1024xf32>
    %20 = arith.truncf %19 : vector<128x1024xf32> to vector<128x1024xbf16>
    %c0_9 = arith.constant 0 : index
    %c0_10 = arith.constant 0 : index
    %21 = vector.load %arg4[%c0_9, %c0_10] : memref<1024x128xbf16, #tpu.memory_space<vmem>>, vector<1024x128xbf16>
    %cst_11 = arith.constant dense<0.000000e+00> : vector<128x128xf32>
    %22 = tpu.matmul %20, %21, %cst_11 {dimension_numbers = #tpu.dot_dimension_numbers<[1], [0], [0], [1], [0, 0, 1, 1], [], []>} : vector<128x1024xbf16>, vector<1024x128xbf16>, vector<128x128xf32> -> vector<128x128xf32>
    %c0_12 = arith.constant 0 : index
    %c0_13 = arith.constant 0 : index
    %23 = vector.load %arg5[%c0_12, %c0_13] : memref<1x128xf32, #tpu.memory_space<vmem>>, vector<1x128xf32>
    %24 = vector.broadcast %23 : vector<1x128xf32> to vector<128x128xf32>
    %25 = arith.addf %22, %24 : vector<128x128xf32>
    %cst_14 = arith.constant 5.000000e-01 : f32
    %26 = vector.broadcast %cst_14 : f32 to vector<128x128xf32>
    %27 = arith.mulf %26, %25 : vector<128x128xf32>
    %cst_15 = arith.constant 4.471500e-02 : f32
    %28 = vector.broadcast %cst_15 : f32 to vector<128x128xf32>
    %29 = arith.mulf %28, %25 : vector<128x128xf32>
    %30 = arith.mulf %29, %25 : vector<128x128xf32>
    %31 = arith.mulf %30, %25 : vector<128x128xf32>
    %32 = arith.addf %25, %31 : vector<128x128xf32>
    %cst_16 = arith.constant 0.797884583 : f32
    %33 = vector.broadcast %cst_16 : f32 to vector<128x128xf32>
    %34 = arith.mulf %33, %32 : vector<128x128xf32>
    %35 = math.tanh %34 : vector<128x128xf32>
    %cst_17 = arith.constant 1.000000e+00 : f32
    %36 = vector.broadcast %cst_17 : f32 to vector<128x128xf32>
    %37 = arith.addf %36, %35 : vector<128x128xf32>
    %38 = arith.mulf %27, %37 : vector<128x128xf32>
    %c0_18 = arith.constant 0 : index
    %c0_19 = arith.constant 0 : index
    %39 = vector.load %arg6[%c0_18, %c0_19] : memref<128x128xf32, #tpu.memory_space<vmem>>, vector<128x128xf32>
    tpu.vector_store %arg6[%c0_18, %c0_19], %38 {strides = array<i32>} : memref<128x128xf32, #tpu.memory_space<vmem>>, vector<128x128xf32>,
    return
  }
  func.func @transform_0(%arg0: i32) -> (i32, i32) {
    %c0_i32 = arith.constant 0 : i32
    %c0_i32_0 = arith.constant 0 : i32
    return %arg0, %c0_i32 : i32, i32
  }
  func.func @transform_1(%arg0: i32) -> (i32, i32) {
    %c0_i32 = arith.constant 0 : i32
    %c0_i32_0 = arith.constant 0 : i32
    %c0_i32_1 = arith.constant 0 : i32
    return %c0_i32, %c0_i32_0 : i32, i32
  }
  func.func @transform_2(%arg0: i32) -> (i32, i32) {
    %c0_i32 = arith.constant 0 : i32
    %c0_i32_0 = arith.constant 0 : i32
    %c0_i32_1 = arith.constant 0 : i32
    return %c0_i32, %c0_i32_0 : i32, i32
  }
  func.func @transform_3(%arg0: i32) -> (i32, i32) {
    %c0_i32 = arith.constant 0 : i32
    %c0_i32_0 = arith.constant 0 : i32
    %c0_i32_1 = arith.constant 0 : i32
    return %c0_i32, %c0_i32_0 : i32, i32
  }
  func.func @transform_4(%arg0: i32) -> (i32, i32) {
    %c0_i32 = arith.constant 0 : i32
    %c0_i32_0 = arith.constant 0 : i32
    %c0_i32_1 = arith.constant 0 : i32
    return %c0_i32, %c0_i32_0 : i32, i32
  }
  func.func @transform_5(%arg0: i32) -> (i32, i32) {
    %c0_i32 = arith.constant 0 : i32
    %c0_i32_0 = arith.constant 0 : i32
    return %arg0, %c0_i32 : i32, i32
  }
}

</mosaic_0001>

<llo_original>
// kernel: tpu_custom_call.1
$region0: #{tpu_custom_call.1}
  #allocation0 [shape = 'u32[]', space=smem, size = 0x4, offset = 0x4, fixed_abs, tag = 'smem constant byte address 0x4 - core index']
  #allocation1 [shape = 'u32[144,128]{1,0:T(1,128)}', space=vmem, size = 0x12000, scoped, tag = 'internal scratch']
  %s0 = inlined_call_operand.vmem [shape: f32[128,64], index: 0, kind: input, shape index: {}]
  %s1 = inlined_call_operand.hbm [shape: bf16[64,1024], index: 1, kind: input, shape index: {}]
  %s2 = inlined_call_operand.vmem [shape: f32[1,1024], index: 2, kind: input, shape index: {}]
  %s3 = inlined_call_operand.hbm [shape: bf16[1024,128], index: 3, kind: input, shape index: {}]
  %s4 = inlined_call_operand.vmem [shape: f32[1,128], index: 4, kind: input, shape index: {}]
  %s5 = inlined_call_operand.hbm [shape: f32[128,128], index: 5, kind: output, shape index: {}]
  %s6 = sld [smem:[#allocation0]]
  $region38: #{tpu_custom_call.1} parent=0
    _
  %s8 = ssub.s32 1, %s6
  %s9 = scalar_select 0, %s8, %s6
  $region1: #{tpu_custom_call.1} parent=0
    #allocation2 [shape = 'u8[131072]{0}', space=vmem, size = 0x20000, scoped, tag = 'input window, operand 1, single buffered']
    #allocation3 [shape = 's32[1]{0}', space=sflag, size = 0x4, scoped, tag = 'scoped memory for tpu_custom_call.1']
    #allocation4 [shape = 's32[1]{0}', space=sflag, size = 0x4, scoped, tag = 'scoped memory for tpu_custom_call.1']
    #allocation5 [shape = 'u8[262144]{0}', space=vmem, size = 0x40000, scoped, tag = 'input window, operand 3, single buffered']
    #allocation6 [shape = 's32[1]{0}', space=sflag, size = 0x4, scoped, tag = 'scoped memory for tpu_custom_call.1']
    #allocation7 [shape = 'u8[65536]{0}', space=vmem, size = 0x10000, scoped, tag = 'output window, operand 0, single buffered']
    %10 = vsyncpa [#allocation3], 0
    %11 = vsyncpa [#allocation6], 0
    %12 = vsyncpa [#allocation4], 0
    // Predicated region
    $region2: #{tpu_custom_call.1} parent=1 // pred_check
      _
    $region3: #{tpu_custom_call.1} parent=1 // pred_check_branch
      %14 = sbr.rel (0) target = $region5
    $region4: #{tpu_custom_call.1} parent=1 // pred_region
      _
    $region5: #{tpu_custom_call.1} parent=1 // pred_fallthru
      _
    // Predicated region
    $region6: #{tpu_custom_call.1} parent=1 // pred_check
      _
    $region7: #{tpu_custom_call.1} parent=1 // pred_check_branch
      %16 = sbr.rel (0) target = $region9
    $region8: #{tpu_custom_call.1} parent=1 // pred_region
      %s18 = ssub.s32 4096, 4096
      %19 = vsyncadd [#allocation3], %s18
      %s20 = sshll.u32 [#allocation2], 4
      %s21 = int_to_ptr.vmem [resolvable:$true] %s20
      %26 = dma.hbm_to_vmem [thread:$0]  %s1, 4096, %s21, [#allocation3], 512, 512, 32
    $region9: #{tpu_custom_call.1} parent=1 // pred_fallthru
      _
    // Predicated region
    $region10: #{tpu_custom_call.1} parent=1 // pred_check
      _
    $region11: #{tpu_custom_call.1} parent=1 // pred_check_branch
      %28 = sbr.rel (0) target = $region13
    $region12: #{tpu_custom_call.1} parent=1 // pred_region
      _
    $region13: #{tpu_custom_call.1} parent=1 // pred_fallthru
      _
    // Predicated region
    $region14: #{tpu_custom_call.1} parent=1 // pred_check
      _
    $region15: #{tpu_custom_call.1} parent=1 // pred_check_branch
      %30 = sbr.rel (0) target = $region17
    $region16: #{tpu_custom_call.1} parent=1 // pred_region
      %s32 = ssub.s32 8192, 8192
      %33 = vsyncadd [#allocation6], %s32
      %s34 = sshll.u32 [#allocation5], 4
      %s35 = int_to_ptr.vmem [resolvable:$true] %s34
      %40 = dma.hbm_to_vmem [thread:$0]  %s3, 8192, %s35, [#allocation6], 64, 64, 4
    $region17: #{tpu_custom_call.1} parent=1 // pred_fallthru
      _
    // Predicated region
    $region18: #{tpu_custom_call.1} parent=1 // pred_check
      _
    $region19: #{tpu_custom_call.1} parent=1 // pred_check_branch
      %42 = sbr.rel (0) target = $region21
    $region20: #{tpu_custom_call.1} parent=1 // pred_region
      _
    $region21: #{tpu_custom_call.1} parent=1 // pred_fallthru
      _
    // Predicated region
    $region22: #{tpu_custom_call.1} parent=1 // pred_check
      _
    $region23: #{tpu_custom_call.1} parent=1 // pred_check_branch
      %44 = sbr.rel (0) target = $region25
    $region24: #{tpu_custom_call.1} parent=1 // pred_region
      %45 = dma.done [#allocation3], 4096
    $region25: #{tpu_custom_call.1} parent=1 // pred_fallthru
      _
    // Predicated region
    $region26: #{tpu_custom_call.1} parent=1 // pred_check
      _
    $region27: #{tpu_custom_call.1} parent=1 // pred_check_branch
      %47 = sbr.rel (0) target = $region29
    $region28: #{tpu_custom_call.1} parent=1 // pred_region
      %48 = dma.done [#allocation6], 8192
    $region29: #{tpu_custom_call.1} parent=1 // pred_fallthru
      _
    %v50 = vld [vmem:[%s0] sm:$0xff]
    %v51 = vld [vmem:[%s0 + $0x8] sm:$0xff]
    %v52 = vld [vmem:[%s0 + $0x10] sm:$0xff]
    %v53 = vld [vmem:[%s0 + $0x18] sm:$0xff]
    %v54 = vld [vmem:[%s0 + $0x20] sm:$0xff]
    %v55 = vld [vmem:[%s0 + $0x28] sm:$0xff]
    %v56 = vld [vmem:[%s0 + $0x30] sm:$0xff]
    %v57 = vld [vmem:[%s0 + $0x38] sm:$0xff]
    %v58 = vld [vmem:[%s0 + $0x40] sm:$0xff]
    %v59 = vld [vmem:[%s0 + $0x48] sm:$0xff]
    %v60 = vld [vmem:[%s0 + $0x50] sm:$0xff]
    %v61 = vld [vmem:[%s0 + $0x58] sm:$0xff]
    %v62 = vld [vmem:[%s0 + $0x60] sm:$0xff]
    %v63 = vld [vmem:[%s0 + $0x68] sm:$0xff]
    %v64 = vld [vmem:[%s0 + $0x70] sm:$0xff]
    %v65 = vld [vmem:[%s0 + $0x78] sm:$0xff]
    %v66 = vpack.c.bf16 %v51, %v50
    %v67 = vpack.c.bf16 %v53, %v52
    %v68 = vpack.c.bf16 %v55, %v54
    %v69 = vpack.c.bf16 %v57, %v56
    %v70 = vpack.c.bf16 %v59, %v58
    %v71 = vpack.c.bf16 %v61, %v60
    %v72 = vpack.c.bf16 %v63, %v62
    %v73 = vpack.c.bf16 %v65, %v64
    %v74 = vld [vmem:[#allocation2] sm:$0xff]
    %v75 = vld [vmem:[#allocation2 + $0x8] sm:$0xff]
    %v76 = vld [vmem:[#allocation2 + $0x10] sm:$0xff]
    %v77 = vld [vmem:[#allocation2 + $0x18] sm:$0xff]
    %v78 = vld [vmem:[#allocation2 + $0x20] sm:$0xff]
    %v79 = vld [vmem:[#allocation2 + $0x28] sm:$0xff]
    %v80 = vld [vmem:[#allocation2 + $0x30] sm:$0xff]
    %v81 = vld [vmem:[#allocation2 + $0x38] sm:$0xff]
    %v82 = vld [vmem:[#allocation2 + $0x40] sm:$0xff]
    %v83 = vld [vmem:[#allocation2 + $0x48] sm:$0xff]
    %v84 = vld [vmem:[#allocation2 + $0x50] sm:$0xff]
    %v85 = vld [vmem:[#allocation2 + $0x58] sm:$0xff]
    %v86 = vld [vmem:[#allocation2 + $0x60] sm:$0xff]
    %v87 = vld [vmem:[#allocation2 + $0x68] sm:$0xff]
    %v88 = vld [vmem:[#allocation2 + $0x70] sm:$0xff]
    %v89 = vld [vmem:[#allocation2 + $0x78] sm:$0xff]
    %v90 = vld [vmem:[#allocation2 + $0x80] sm:$0xff]
    %v91 = vld [vmem:[#allocation2 + $0x88] sm:$0xff]
    %v92 = vld [vmem:[#allocation2 + $0x90] sm:$0xff]
    %v93 = vld [vmem:[#allocation2 + $0x98] sm:$0xff]
    %v94 = vld [vmem:[#allocation2 + $0xa0] sm:$0xff]
    %v95 = vld [vmem:[#allocation2 + $0xa8] sm:$0xff]
    %v96 = vld [vmem:[#allocation2 + $0xb0] sm:$0xff]
    %v97 = vld [vmem:[#allocation2 + $0xb8] sm:$0xff]
    %v98 = vld [vmem:[#allocation2 + $0xc0] sm:$0xff]
    %v99 = vld [vmem:[#allocation2 + $0xc8] sm:$0xff]
    %v100 = vld [vmem:[#allocation2 + $0xd0] sm:$0xff]
    %v101 = vld [vmem:[#allocation2 + $0xd8] sm:$0xff]
    %v102 = vld [vmem:[#allocation2 + $0xe0] sm:$0xff]
    %v103 = vld [vmem:[#allocation2 + $0xe8] sm:$0xff]
    %v104 = vld [vmem:[#allocation2 + $0xf0] sm:$0xff]
    %v105 = vld [vmem:[#allocation2 + $0xf8] sm:$0xff]
    %v106 = vld [vmem:[%s2] sm:$0xff]
    %v108 = vlaneseq
    %v109 = vshrl.u32 %v108, 7
    %v110 = vsub.s32 0, %v109
    %v111 = vrot.slane %v106, %v110
    %v112 = vlaneseq
    %v113 = vshrl.u32 %v112, 7
    %v114 = vsub.s32 1, %v113
    %v115 = vrot.slane %v106, %v114
    %v116 = vlaneseq
    %v117 = vshrl.u32 %v116, 7
    %v118 = vsub.s32 2, %v117
    %v119 = vrot.slane %v106, %v118
    %v120 = vlaneseq
    %v121 = vshrl.u32 %v120, 7
    %v122 = vsub.s32 3, %v121
    %v123 = vrot.slane %v106, %v122
    %v124 = vlaneseq
    %v125 = vshrl.u32 %v124, 7
    %v126 = vsub.s32 4, %v125
    %v127 = vrot.slane %v106, %v126
    %v128 = vlaneseq
    %v129 = vshrl.u32 %v128, 7
    %v130 = vsub.s32 5, %v129
    %v131 = vrot.slane %v106, %v130
    %v132 = vlaneseq
    %v133 = vshrl.u32 %v132, 7
    %v134 = vsub.s32 6, %v133
    %v135 = vrot.slane %v106, %v134
    %v136 = vlaneseq
    %v137 = vshrl.u32 %v136, 7
    %v138 = vsub.s32 7, %v137
    %v139 = vrot.slane %v106, %v138
    %v180 = vunpack.c.l.b16 %v74
    %v181 = vunpack.c.h.b16 %v74
    %v182 = vunpack.c.l.b16 %v75
    %v183 = vunpack.c.h.b16 %v75
    %v184 = vunpack.c.l.b16 %v76
    %v185 = vunpack.c.h.b16 %v76
    %v186 = vunpack.c.l.b16 %v77
    %v187 = vunpack.c.h.b16 %v77
    %v188 = vunpack.c.l.b16 %v78
    %v189 = vunpack.c.h.b16 %v78
    %v190 = vunpack.c.l.b16 %v79
    %v191 = vunpack.c.h.b16 %v79
    %v192 = vunpack.c.l.b16 %v80
    %v193 = vunpack.c.h.b16 %v80
    %v194 = vunpack.c.l.b16 %v81
    %v195 = vunpack.c.h.b16 %v81
    %v196 = vunpack.c.l.b16 %v82
    %v197 = vunpack.c.h.b16 %v82
    %v198 = vunpack.c.l.b16 %v83
    %v199 = vunpack.c.h.b16 %v83
    %v200 = vunpack.c.l.b16 %v84
    %v201 = vunpack.c.h.b16 %v84
    %v202 = vunpack.c.l.b16 %v85
    %v203 = vunpack.c.h.b16 %v85
    %v204 = vunpack.c.l.b16 %v86
    %v205 = vunpack.c.h.b16 %v86
    %v206 = vunpack.c.l.b16 %v87
    %v207 = vunpack.c.h.b16 %v87
    %v208 = vunpack.c.l.b16 %v88
    %v209 = vunpack.c.h.b16 %v88
    %v210 = vunpack.c.l.b16 %v89
    %v211 = vunpack.c.h.b16 %v89
    %v212 = vunpack.c.l.b16 %v90
    %v213 = vunpack.c.h.b16 %v90
    %v214 = vunpack.c.l.b16 %v91
    %v215 = vunpack.c.h.b16 %v91
    %v216 = vunpack.c.l.b16 %v92
    %v217 = vunpack.c.h.b16 %v92
    %v218 = vunpack.c.l.b16 %v93
    %v219 = vunpack.c.h.b16 %v93
    %v220 = vunpack.c.l.b16 %v94
    %v221 = vunpack.c.h.b16 %v94
    %v222 = vunpack.c.l.b16 %v95
    %v223 = vunpack.c.h.b16 %v95
    %v224 = vunpack.c.l.b16 %v96
    %v225 = vunpack.c.h.b16 %v96
    %v226 = vunpack.c.l.b16 %v97
    %v227 = vunpack.c.h.b16 %v97
    %v228 = vunpack.c.l.b16 %v98
    %v229 = vunpack.c.h.b16 %v98
    %v230 = vunpack.c.l.b16 %v99
    %v231 = vunpack.c.h.b16 %v99
    %v232 = vunpack.c.l.b16 %v100
    %v233 = vunpack.c.h.b16 %v100
    %v234 = vunpack.c.l.b16 %v101
    %v235 = vunpack.c.h.b16 %v101
    %v236 = vunpack.c.l.b16 %v102
    %v237 = vunpack.c.h.b16 %v102
    %v238 = vunpack.c.l.b16 %v103
    %v239 = vunpack.c.h.b16 %v103
    %v240 = vunpack.c.l.b16 %v104
    %v241 = vunpack.c.h.b16 %v104
    %v242 = vunpack.c.l.b16 %v105
    %v243 = vunpack.c.h.b16 %v105
    %v244 = vpack.c.b16 %v188, %v180
    %v245 = vpack.c.b16 %v189, %v181
    %v246 = vpack.c.b16 %v190, %v182
    %v247 = vpack.c.b16 %v191, %v183
    %v248 = vpack.c.b16 %v192, %v184
    %v249 = vpack.c.b16 %v193, %v185
    %v250 = vpack.c.b16 %v194, %v186
    %v251 = vpack.c.b16 %v195, %v187
    %v252 = vpack.c.b16 %v204, %v196
    %v253 = vpack.c.b16 %v205, %v197
    %v254 = vpack.c.b16 %v206, %v198
    %v255 = vpack.c.b16 %v207, %v199
    %v256 = vpack.c.b16 %v208, %v200
    %v257 = vpack.c.b16 %v209, %v201
    %v258 = vpack.c.b16 %v210, %v202
    %v259 = vpack.c.b16 %v211, %v203
    %v260 = vpack.c.b16 %v220, %v212
    %v261 = vpack.c.b16 %v221, %v213
    %v262 = vpack.c.b16 %v222, %v214
    %v263 = vpack.c.b16 %v223, %v215
    %v264 = vpack.c.b16 %v224, %v216
    %v265 = vpack.c.b16 %v225, %v217
    %v266 = vpack.c.b16 %v226, %v218
    %v267 = vpack.c.b16 %v227, %v219
    %v268 = vpack.c.b16 %v236, %v228
    %v269 = vpack.c.b16 %v237, %v229
    %v270 = vpack.c.b16 %v238, %v230
    %v271 = vpack.c.b16 %v239, %v231
    %v272 = vpack.c.b16 %v240, %v232
    %v273 = vpack.c.b16 %v241, %v233
    %v274 = vpack.c.b16 %v242, %v234
    %v275 = vpack.c.b16 %v243, %v235
    %vm308 = vcmask 523264
    %v310 = vsel %vm308, %v66, 0
    %v313 = vsel %vm308, %v67, 0
    %v316 = vsel %vm308, %v68, 0
    %v319 = vsel %vm308, %v69, 0
    %v322 = vsel %vm308, %v70, 0
    %v325 = vsel %vm308, %v71, 0
    %v328 = vsel %vm308, %v72, 0
    %v331 = vsel %vm308, %v73, 0
    %333 = vmatprep.subr.bf16.mxu0 0
    %334 = vmatpush1.bf16.msra.mxu0 0
    %335 = vmatprep.subr.bf16.mxu0 0
    %336 = vmatpush1.bf16.msra.mxu0 0
    %337 = vmatprep.subr.bf16.mxu0 0
    %338 = vmatpush1.bf16.msra.mxu0 0
    %339 = vmatprep.subr.bf16.mxu0 0
    %340 = vmatpush1.bf16.msra.mxu0 0
    %341 = vmatprep.subr.bf16.mxu0 %v269
    %342 = vmatpush1.bf16.msra.mxu0 %v268
    %343 = vmatprep.subr.bf16.mxu0 %v261
    %344 = vmatpush1.bf16.msra.mxu0 %v260
    %345 = vmatprep.subr.bf16.mxu0 %v253
    %346 = vmatpush1.bf16.msra.mxu0 %v252
    %347 = vmatprep.subr.bf16.mxu0 %v245
    %348 = vmatpush1.bf16.msra.mxu0 %v244
    %349 = vmatprep.subr.bf16.mxu0 0
    %350 = vmatpush2.bf16.msra.mxu0 0
    %351 = vmatprep.subr.bf16.mxu0 0
    %352 = vmatpush2.bf16.msra.mxu0 0
    %353 = vmatprep.subr.bf16.mxu0 0
    %354 = vmatpush2.bf16.msra.mxu0 0
    %355 = vmatprep.subr.bf16.mxu0 0
    %356 = vmatpush2.bf16.msra.mxu0 0
    %357 = vmatprep.subr.bf16.mxu0 0
    %358 = vmatpush2.bf16.msra.mxu0 0
    %359 = vmatprep.subr.bf16.mxu0 0
    %360 = vmatpush2.bf16.msra.mxu0 0
    %361 = vmatprep.subr.bf16.mxu0 0
    %362 = vmatpush2.bf16.msra.mxu0 0
    %363 = vmatprep.subr.bf16.mxu0 0
    %364 = vmatpush2.bf16.msra.mxu0 0
    %365 = vmatprep.mubr.bf16.mxu0 0
    %366 = vmatmul.mubr.bf16.gmra.mxu0 %v310
    %v367 = vpop.f32.mrf.mxu0
    %v368 = vadd.f32 %v111, %v367
    %v369 = vpop.f32.mrf.mxu0
    %v370 = vadd.f32 %v115, %v369
    %v371 = vpop.f32.mrf.mxu0
    %v372 = vadd.f32 %v111, %v371
    %v373 = vpop.f32.mrf.mxu0
    %v374 = vadd.f32 %v115, %v373
    %375 = vmatprep.mubr.bf16.mxu0 0
    %376 = vmatmul.mubr.bf16.gmra.mxu0 %v313
    %v377 = vpop.f32.mrf.mxu0
    %v378 = vadd.f32 %v111, %v377
    %v379 = vpop.f32.mrf.mxu0
    %v380 = vadd.f32 %v115, %v379
    %v381 = vpop.f32.mrf.mxu0
    %v382 = vadd.f32 %v111, %v381
    %v383 = vpop.f32.mrf.mxu0
    %v384 = vadd.f32 %v115, %v383
    %385 = vmatprep.mubr.bf16.mxu0 0
    %386 = vmatmul.mubr.bf16.gmra.mxu0 %v316
    %v387 = vpop.f32.mrf.mxu0
    %v388 = vadd.f32 %v111, %v387
    %v389 = vpop.f32.mrf.mxu0
    %v390 = vadd.f32 %v115, %v389
    %v391 = vpop.f32.mrf.mxu0
    %v392 = vadd.f32 %v111, %v391
    %v393 = vpop.f32.mrf.mxu0
    %v394 = vadd.f32 %v115, %v393
    %395 = vmatprep.mubr.bf16.mxu0 0
    %396 = vmatmul.mubr.bf16.gmra.mxu0 %v319
    %v397 = vpop.f32.mrf.mxu0
    %v398 = vadd.f32 %v111, %v397
    %v399 = vpop.f32.mrf.mxu0
    %v400 = vadd.f32 %v115, %v399
    %v401 = vpop.f32.mrf.mxu0
    %v402 = vadd.f32 %v111, %v401
    %v403 = vpop.f32.mrf.mxu0
    %v404 = vadd.f32 %v115, %v403
    %405 = vmatprep.mubr.bf16.mxu0 0
    %406 = vmatmul.mubr.bf16.gmra.mxu0 %v322
    %v407 = vpop.f32.mrf.mxu0
    %v408 = vadd.f32 %v111, %v407
    %v409 = vpop.f32.mrf.mxu0
    %v410 = vadd.f32 %v115, %v409
    %v411 = vpop.f32.mrf.mxu0
    %v412 = vadd.f32 %v111, %v411
    %v413 = vpop.f32.mrf.mxu0
    %v414 = vadd.f32 %v115, %v413
    %415 = vmatprep.mubr.bf16.mxu0 0
    %416 = vmatmul.mubr.bf16.gmra.mxu0 %v325
    %v417 = vpop.f32.mrf.mxu0
    %v418 = vadd.f32 %v111, %v417
    %v419 = vpop.f32.mrf.mxu0
    %v420 = vadd.f32 %v115, %v419
    %v421 = vpop.f32.mrf.mxu0
    %v422 = vadd.f32 %v111, %v421
    %v423 = vpop.f32.mrf.mxu0
    %v424 = vadd.f32 %v115, %v423
    %425 = vmatprep.mubr.bf16.mxu0 0
    %426 = vmatmul.mubr.bf16.gmra.mxu0 %v328
    %v427 = vpop.f32.mrf.mxu0
    %v428 = vadd.f32 %v111, %v427
    %v429 = vpop.f32.mrf.mxu0
    %v430 = vadd.f32 %v115, %v429
    %v431 = vpop.f32.mrf.mxu0
    %v432 = vadd.f32 %v111, %v431
    %v433 = vpop.f32.mrf.mxu0
    %v434 = vadd.f32 %v115, %v433
    %435 = vmatprep.mubr.bf16.mxu0 0
    %436 = vmatmul.mubr.bf16.gmra.mxu0 %v331
    %v437 = vpop.f32.mrf.mxu0
    %v438 = vadd.f32 %v111, %v437
    %v439 = vpop.f32.mrf.mxu0
    %v440 = vadd.f32 %v115, %v439
    %v441 = vpop.f32.mrf.mxu0
    %v442 = vadd.f32 %v111, %v441
    %v443 = vpop.f32.mrf.mxu0
    %v444 = vadd.f32 %v115, %v443
    %445 = vdwg.mxu0
    %446 = vmatprep.subr.bf16.mxu0 0
    %447 = vmatpush1.bf16.msra.mxu0 0
    %448 = vmatprep.subr.bf16.mxu0 0
    %449 = vmatpush1.bf16.msra.mxu0 0
    %450 = vmatprep.subr.bf16.mxu0 0
    %451 = vmatpush1.bf16.msra.mxu0 0
    %452 = vmatprep.subr.bf16.mxu0 0
    %453 = vmatpush1.bf16.msra.mxu0 0
    %454 = vmatprep.subr.bf16.mxu0 %v271
    %455 = vmatpush1.bf16.msra.mxu0 %v270
    %456 = vmatprep.subr.bf16.mxu0 %v263
    %457 = vmatpush1.bf16.msra.mxu0 %v262
    %458 = vmatprep.subr.bf16.mxu0 %v255
    %459 = vmatpush1.bf16.msra.mxu0 %v254
    %460 = vmatprep.subr.bf16.mxu0 %v247
    %461 = vmatpush1.bf16.msra.mxu0 %v246
    %462 = vmatprep.subr.bf16.mxu0 0
    %463 = vmatpush2.bf16.msra.mxu0 0
    %464 = vmatprep.subr.bf16.mxu0 0
    %465 = vmatpush2.bf16.msra.mxu0 0
    %466 = vmatprep.subr.bf16.mxu0 0
    %467 = vmatpush2.bf16.msra.mxu0 0
    %468 = vmatprep.subr.bf16.mxu0 0
    %469 = vmatpush2.bf16.msra.mxu0 0
    %470 = vmatprep.subr.bf16.mxu0 0
    %471 = vmatpush2.bf16.msra.mxu0 0
    %472 = vmatprep.subr.bf16.mxu0 0
    %473 = vmatpush2.bf16.msra.mxu0 0
    %474 = vmatprep.subr.bf16.mxu0 0
    %475 = vmatpush2.bf16.msra.mxu0 0
    %476 = vmatprep.subr.bf16.mxu0 0
    %477 = vmatpush2.bf16.msra.mxu0 0
    %478 = vmatprep.mubr.bf16.mxu0 0
    %479 = vmatmul.mubr.bf16.gmra.mxu0 %v310
    %v480 = vpop.f32.mrf.mxu0
    %v481 = vadd.f32 %v119, %v480
    %v482 = vpop.f32.mrf.mxu0
    %v483 = vadd.f32 %v123, %v482
    %v484 = vpop.f32.mrf.mxu0
    %v485 = vadd.f32 %v119, %v484
    %v486 = vpop.f32.mrf.mxu0
    %v487 = vadd.f32 %v123, %v486
    %488 = vmatprep.mubr.bf16.mxu0 0
    %489 = vmatmul.mubr.bf16.gmra.mxu0 %v313
    %v490 = vpop.f32.mrf.mxu0
    %v491 = vadd.f32 %v119, %v490
    %v492 = vpop.f32.mrf.mxu0
    %v493 = vadd.f32 %v123, %v492
    %v494 = vpop.f32.mrf.mxu0
    %v495 = vadd.f32 %v119, %v494
    %v496 = vpop.f32.mrf.mxu0
    %v497 = vadd.f32 %v123, %v496
    %498 = vmatprep.mubr.bf16.mxu0 0
    %499 = vmatmul.mubr.bf16.gmra.mxu0 %v316
    %v500 = vpop.f32.mrf.mxu0
    %v501 = vadd.f32 %v119, %v500
    %v502 = vpop.f32.mrf.mxu0
    %v503 = vadd.f32 %v123, %v502
    %v504 = vpop.f32.mrf.mxu0
    %v505 = vadd.f32 %v119, %v504
    %v506 = vpop.f32.mrf.mxu0
    %v507 = vadd.f32 %v123, %v506
    %508 = vmatprep.mubr.bf16.mxu0 0
    %509 = vmatmul.mubr.bf16.gmra.mxu0 %v319
    %v510 = vpop.f32.mrf.mxu0
    %v511 = vadd.f32 %v119, %v510
    %v512 = vpop.f32.mrf.mxu0
    %v513 = vadd.f32 %v123, %v512
    %v514 = vpop.f32.mrf.mxu0
    %v515 = vadd.f32 %v119, %v514
    %v516 = vpop.f32.mrf.mxu0
    %v517 = vadd.f32 %v123, %v516
    %518 = vmatprep.mubr.bf16.mxu0 0
    %519 = vmatmul.mubr.bf16.gmra.mxu0 %v322
    %v520 = vpop.f32.mrf.mxu0
    %v521 = vadd.f32 %v119, %v520
    %v522 = vpop.f32.mrf.mxu0
    %v523 = vadd.f32 %v123, %v522
    %v524 = vpop.f32.mrf.mxu0
    %v525 = vadd.f32 %v119, %v524
    %v526 = vpop.f32.mrf.mxu0
    %v527 = vadd.f32 %v123, %v526
    %528 = vmatprep.mubr.bf16.mxu0 0
    %529 = vmatmul.mubr.bf16.gmra.mxu0 %v325
    %v530 = vpop.f32.mrf.mxu0
    %v531 = vadd.f32 %v119, %v530
    %v532 = vpop.f32.mrf.mxu0
    %v533 = vadd.f32 %v123, %v532
    %v534 = vpop.f32.mrf.mxu0
    %v535 = vadd.f32 %v119, %v534
    %v536 = vpop.f32.mrf.mxu0
    %v537 = vadd.f32 %v123, %v536
    %538 = vmatprep.mubr.bf16.mxu0 0
    %539 = vmatmul.mubr.bf16.gmra.mxu0 %v328
    %v540 = vpop.f32.mrf.mxu0
    %v541 = vadd.f32 %v119, %v540
    %v542 = vpop.f32.mrf.mxu0
    %v543 = vadd.f32 %v123, %v542
    %v544 = vpop.f32.mrf.mxu0
    %v545 = vadd.f32 %v119, %v544
    %v546 = vpop.f32.mrf.mxu0
    %v547 = vadd.f32 %v123, %v546
    %548 = vmatprep.mubr.bf16.mxu0 0
    %549 = vmatmul.mubr.bf16.gmra.mxu0 %v331
    %v550 = vpop.f32.mrf.mxu0
    %v551 = vadd.f32 %v119, %v550
    %v552 = vpop.f32.mrf.mxu0
    %v553 = vadd.f32 %v123, %v552
    %v554 = vpop.f32.mrf.mxu0
    %v555 = vadd.f32 %v119, %v554
    %v556 = vpop.f32.mrf.mxu0
    %v557 = vadd.f32 %v123, %v556
    %558 = vdwg.mxu0
    %559 = vmatprep.subr.bf16.mxu0 0
    %560 = vmatpush1.bf16.msra.mxu0 0
    %561 = vmatprep.subr.bf16.mxu0 0
    %562 = vmatpush1.bf16.msra.mxu0 0
    %563 = vmatprep.subr.bf16.mxu0 0
    %564 = vmatpush1.bf16.msra.mxu0 0
    %565 = vmatprep.subr.bf16.mxu0 0
    %566 = vmatpush1.bf16.msra.mxu0 0
    %567 = vmatprep.subr.bf16.mxu0 %v273
    %568 = vmatpush1.bf16.msra.mxu0 %v272
    %569 = vmatprep.subr.bf16.mxu0 %v265
    %570 = vmatpush1.bf16.msra.mxu0 %v264
    %571 = vmatprep.subr.bf16.mxu0 %v257
    %572 = vmatpush1.bf16.msra.mxu0 %v256
    %573 = vmatprep.subr.bf16.mxu0 %v249
    %574 = vmatpush1.bf16.msra.mxu0 %v248
    %575 = vmatprep.subr.bf16.mxu0 0
    %576 = vmatpush2.bf16.msra.mxu0 0
    %577 = vmatprep.subr.bf16.mxu0 0
    %578 = vmatpush2.bf16.msra.mxu0 0
    %579 = vmatprep.subr.bf16.mxu0 0
    %580 = vmatpush2.bf16.msra.mxu0 0
    %581 = vmatprep.subr.bf16.mxu0 0
    %582 = vmatpush2.bf16.msra.mxu0 0
    %583 = vmatprep.subr.bf16.mxu0 0
    %584 = vmatpush2.bf16.msra.mxu0 0
    %585 = vmatprep.subr.bf16.mxu0 0
    %586 = vmatpush2.bf16.msra.mxu0 0
    %587 = vmatprep.subr.bf16.mxu0 0
    %588 = vmatpush2.bf16.msra.mxu0 0
    %589 = vmatprep.subr.bf16.mxu0 0
    %590 = vmatpush2.bf16.msra.mxu0 0
    %591 = vmatprep.mubr.bf16.mxu0 0
    %592 = vmatmul.mubr.bf16.gmra.mxu0 %v310
    %v593 = vpop.f32.mrf.mxu0
    %v594 = vadd.f32 %v127, %v593
    %v595 = vpop.f32.mrf.mxu0
    %v596 = vadd.f32 %v131, %v595
    %v597 = vpop.f32.mrf.mxu0
    %v598 = vadd.f32 %v127, %v597
    %v599 = vpop.f32.mrf.mxu0
    %v600 = vadd.f32 %v131, %v599
    %601 = vmatprep.mubr.bf16.mxu0 0
    %602 = vmatmul.mubr.bf16.gmra.mxu0 %v313
    %v603 = vpop.f32.mrf.mxu0
    %v604 = vadd.f32 %v127, %v603
    %v605 = vpop.f32.mrf.mxu0
    %v606 = vadd.f32 %v131, %v605
    %v607 = vpop.f32.mrf.mxu0
    %v608 = vadd.f32 %v127, %v607
    %v609 = vpop.f32.mrf.mxu0
    %v610 = vadd.f32 %v131, %v609
    %611 = vmatprep.mubr.bf16.mxu0 0
    %612 = vmatmul.mubr.bf16.gmra.mxu0 %v316
    %v613 = vpop.f32.mrf.mxu0
    %v614 = vadd.f32 %v127, %v613
    %v615 = vpop.f32.mrf.mxu0
    %v616 = vadd.f32 %v131, %v615
    %v617 = vpop.f32.mrf.mxu0
    %v618 = vadd.f32 %v127, %v617
    %v619 = vpop.f32.mrf.mxu0
    %v620 = vadd.f32 %v131, %v619
    %621 = vmatprep.mubr.bf16.mxu0 0
    %622 = vmatmul.mubr.bf16.gmra.mxu0 %v319
    %v623 = vpop.f32.mrf.mxu0
    %v624 = vadd.f32 %v127, %v623
    %v625 = vpop.f32.mrf.mxu0
    %v626 = vadd.f32 %v131, %v625
    %v627 = vpop.f32.mrf.mxu0
    %v628 = vadd.f32 %v127, %v627
    %v629 = vpop.f32.mrf.mxu0
    %v630 = vadd.f32 %v131, %v629
    %631 = vmatprep.mubr.bf16.mxu0 0
    %632 = vmatmul.mubr.bf16.gmra.mxu0 %v322
    %v633 = vpop.f32.mrf.mxu0
    %v634 = vadd.f32 %v127, %v633
    %v635 = vpop.f32.mrf.mxu0
    %v636 = vadd.f32 %v131, %v635
    %v637 = vpop.f32.mrf.mxu0
    %v638 = vadd.f32 %v127, %v637
    %v639 = vpop.f32.mrf.mxu0
    %v640 = vadd.f32 %v131, %v639
    %641 = vmatprep.mubr.bf16.mxu0 0
    %642 = vmatmul.mubr.bf16.gmra.mxu0 %v325
    %v643 = vpop.f32.mrf.mxu0
    %v644 = vadd.f32 %v127, %v643
    %v645 = vpop.f32.mrf.mxu0
    %v646 = vadd.f32 %v131, %v645
    %v647 = vpop.f32.mrf.mxu0
    %v648 = vadd.f32 %v127, %v647
    %v649 = vpop.f32.mrf.mxu0
    %v650 = vadd.f32 %v131, %v649
    %651 = vmatprep.mubr.bf16.mxu0 0
    %652 = vmatmul.mubr.bf16.gmra.mxu0 %v328
    %v653 = vpop.f32.mrf.mxu0
    %v654 = vadd.f32 %v127, %v653
    %v655 = vpop.f32.mrf.mxu0
    %v656 = vadd.f32 %v131, %v655
    %v657 = vpop.f32.mrf.mxu0
    %v658 = vadd.f32 %v127, %v657
    %v659 = vpop.f32.mrf.mxu0
    %v660 = vadd.f32 %v131, %v659
    %661 = vmatprep.mubr.bf16.mxu0 0
    %662 = vmatmul.mubr.bf16.gmra.mxu0 %v331
    %v663 = vpop.f32.mrf.mxu0
    %v664 = vadd.f32 %v127, %v663
    %v665 = vpop.f32.mrf.mxu0
    %v666 = vadd.f32 %v131, %v665
    %v667 = vpop.f32.mrf.mxu0
    %v668 = vadd.f32 %v127, %v667
    %v669 = vpop.f32.mrf.mxu0
    %v670 = vadd.f32 %v131, %v669
    %671 = vdwg.mxu0
    %672 = vmatprep.subr.bf16.mxu0 0
    %673 = vmatpush1.bf16.msra.mxu0 0
    %674 = vmatprep.subr.bf16.mxu0 0
    %675 = vmatpush1.bf16.msra.mxu0 0
    %676 = vmatprep.subr.bf16.mxu0 0
    %677 = vmatpush1.bf16.msra.mxu0 0
    %678 = vmatprep.subr.bf16.mxu0 0
    %679 = vmatpush1.bf16.msra.mxu0 0
    %680 = vmatprep.subr.bf16.mxu0 %v275
    %681 = vmatpush1.bf16.msra.mxu0 %v274
    %682 = vmatprep.subr.bf16.mxu0 %v267
    %683 = vmatpush1.bf16.msra.mxu0 %v266
    %684 = vmatprep.subr.bf16.mxu0 %v259
    %685 = vmatpush1.bf16.msra.mxu0 %v258
    %686 = vmatprep.subr.bf16.mxu0 %v251
    %687 = vmatpush1.bf16.msra.mxu0 %v250
    %688 = vmatprep.subr.bf16.mxu0 0
    %689 = vmatpush2.bf16.msra.mxu0 0
    %690 = vmatprep.subr.bf16.mxu0 0
    %691 = vmatpush2.bf16.msra.mxu0 0
    %692 = vmatprep.subr.bf16.mxu0 0
    %693 = vmatpush2.bf16.msra.mxu0 0
    %694 = vmatprep.subr.bf16.mxu0 0
    %695 = vmatpush2.bf16.msra.mxu0 0
    %696 = vmatprep.subr.bf16.mxu0 0
    %697 = vmatpush2.bf16.msra.mxu0 0
    %698 = vmatprep.subr.bf16.mxu0 0
    %699 = vmatpush2.bf16.msra.mxu0 0
    %700 = vmatprep.subr.bf16.mxu0 0
    %701 = vmatpush2.bf16.msra.mxu0 0
    %702 = vmatprep.subr.bf16.mxu0 0
    %703 = vmatpush2.bf16.msra.mxu0 0
    %704 = vmatprep.mubr.bf16.mxu0 0
    %705 = vmatmul.mubr.bf16.gmra.mxu0 %v310
    %v706 = vpop.f32.mrf.mxu0
    %v707 = vadd.f32 %v135, %v706
    %v708 = vpop.f32.mrf.mxu0
    %v709 = vadd.f32 %v139, %v708
    %v710 = vpop.f32.mrf.mxu0
    %v711 = vadd.f32 %v135, %v710
    %v712 = vpop.f32.mrf.mxu0
    %v713 = vadd.f32 %v139, %v712
    %714 = vmatprep.mubr.bf16.mxu0 0
    %715 = vmatmul.mubr.bf16.gmra.mxu0 %v313
    %v716 = vpop.f32.mrf.mxu0
    %v717 = vadd.f32 %v135, %v716
    %v718 = vpop.f32.mrf.mxu0
    %v719 = vadd.f32 %v139, %v718
    %v720 = vpop.f32.mrf.mxu0
    %v721 = vadd.f32 %v135, %v720
    %v722 = vpop.f32.mrf.mxu0
    %v723 = vadd.f32 %v139, %v722
    %724 = vmatprep.mubr.bf16.mxu0 0
    %725 = vmatmul.mubr.bf16.gmra.mxu0 %v316
    %v726 = vpop.f32.mrf.mxu0
    %v727 = vadd.f32 %v135, %v726
    %v728 = vpop.f32.mrf.mxu0
    %v729 = vadd.f32 %v139, %v728
    %v730 = vpop.f32.mrf.mxu0
    %v731 = vadd.f32 %v135, %v730
    %v732 = vpop.f32.mrf.mxu0
    %v733 = vadd.f32 %v139, %v732
    %734 = vmatprep.mubr.bf16.mxu0 0
    %735 = vmatmul.mubr.bf16.gmra.mxu0 %v319
    %v736 = vpop.f32.mrf.mxu0
    %v737 = vadd.f32 %v135, %v736
    %v738 = vpop.f32.mrf.mxu0
    %v739 = vadd.f32 %v139, %v738
    %v740 = vpop.f32.mrf.mxu0
    %v741 = vadd.f32 %v135, %v740
    %v742 = vpop.f32.mrf.mxu0
    %v743 = vadd.f32 %v139, %v742
    %744 = vmatprep.mubr.bf16.mxu0 0
    %745 = vmatmul.mubr.bf16.gmra.mxu0 %v322
    %v746 = vpop.f32.mrf.mxu0
    %v747 = vadd.f32 %v135, %v746
    %v748 = vpop.f32.mrf.mxu0
    %v749 = vadd.f32 %v139, %v748
    %v750 = vpop.f32.mrf.mxu0
    %v751 = vadd.f32 %v135, %v750
    %v752 = vpop.f32.mrf.mxu0
    %v753 = vadd.f32 %v139, %v752
    %754 = vmatprep.mubr.bf16.mxu0 0
    %755 = vmatmul.mubr.bf16.gmra.mxu0 %v325
    %v756 = vpop.f32.mrf.mxu0
    %v757 = vadd.f32 %v135, %v756
    %v758 = vpop.f32.mrf.mxu0
    %v759 = vadd.f32 %v139, %v758
    %v760 = vpop.f32.mrf.mxu0
    %v761 = vadd.f32 %v135, %v760
    %v762 = vpop.f32.mrf.mxu0
    %v763 = vadd.f32 %v139, %v762
    %764 = vmatprep.mubr.bf16.mxu0 0
    %765 = vmatmul.mubr.bf16.gmra.mxu0 %v328
    %v766 = vpop.f32.mrf.mxu0
    %v767 = vadd.f32 %v135, %v766
    %v768 = vpop.f32.mrf.mxu0
    %v769 = vadd.f32 %v139, %v768
    %v770 = vpop.f32.mrf.mxu0
    %v771 = vadd.f32 %v135, %v770
    %v772 = vpop.f32.mrf.mxu0
    %v773 = vadd.f32 %v139, %v772
    %774 = vmatprep.mubr.bf16.mxu0 0
    %775 = vmatmul.mubr.bf16.gmra.mxu0 %v331
    %v776 = vpop.f32.mrf.mxu0
    %v777 = vadd.f32 %v135, %v776
    %v778 = vpop.f32.mrf.mxu0
    %v779 = vadd.f32 %v139, %v778
    %v780 = vpop.f32.mrf.mxu0
    %v781 = vadd.f32 %v135, %v780
    %v782 = vpop.f32.mrf.mxu0
    %v783 = vadd.f32 %v139, %v782
    %784 = vdwg.mxu0
    %v785 = vmul.f32 %v368, 0.5
    %v786 = vmul.f32 %v370, 0.5
    %v787 = vmul.f32 %v481, 0.5
    %v788 = vmul.f32 %v483, 0.5
    %v789 = vmul.f32 %v594, 0.5
    %v790 = vmul.f32 %v596, 0.5
    %v791 = vmul.f32 %v707, 0.5
    %v792 = vmul.f32 %v709, 0.5
    %v793 = vmul.f32 %v372, 0.5
    %v794 = vmul.f32 %v374, 0.5
    %v795 = vmul.f32 %v485, 0.5
    %v796 = vmul.f32 %v487, 0.5
    %v797 = vmul.f32 %v598, 0.5
    %v798 = vmul.f32 %v600, 0.5
    %v799 = vmul.f32 %v711, 0.5
    %v800 = vmul.f32 %v713, 0.5
    %v801 = vmul.f32 %v378, 0.5
    %v802 = vmul.f32 %v380, 0.5
    %v803 = vmul.f32 %v491, 0.5
    %v804 = vmul.f32 %v493, 0.5
    %v805 = vmul.f32 %v604, 0.5
    %v806 = vmul.f32 %v606, 0.5
    %v807 = vmul.f32 %v717, 0.5
    %v808 = vmul.f32 %v719, 0.5
    %v809 = vmul.f32 %v382, 0.5
    %v810 = vmul.f32 %v384, 0.5
    %v811 = vmul.f32 %v495, 0.5
    %v812 = vmul.f32 %v497, 0.5
    %v813 = vmul.f32 %v608, 0.5
    %v814 = vmul.f32 %v610, 0.5
    %v815 = vmul.f32 %v721, 0.5
    %v816 = vmul.f32 %v723, 0.5
    %v817 = vmul.f32 %v388, 0.5
    %v818 = vmul.f32 %v390, 0.5
    %v819 = vmul.f32 %v501, 0.5
    %v820 = vmul.f32 %v503, 0.5
    %v821 = vmul.f32 %v614, 0.5
    %v822 = vmul.f32 %v616, 0.5
    %v823 = vmul.f32 %v727, 0.5
    %v824 = vmul.f32 %v729, 0.5
    %v825 = vmul.f32 %v392, 0.5
    %v826 = vmul.f32 %v394, 0.5
    %v827 = vmul.f32 %v505, 0.5
    %v828 = vmul.f32 %v507, 0.5
    %v829 = vmul.f32 %v618, 0.5
    %v830 = vmul.f32 %v620, 0.5
    %v831 = vmul.f32 %v731, 0.5
    %v832 = vmul.f32 %v733, 0.5
    %v833 = vmul.f32 %v398, 0.5
    %v834 = vmul.f32 %v400, 0.5
    %v835 = vmul.f32 %v511, 0.5
    %v836 = vmul.f32 %v513, 0.5
    %v837 = vmul.f32 %v624, 0.5
    %v838 = vmul.f32 %v626, 0.5
    %v839 = vmul.f32 %v737, 0.5
    %v840 = vmul.f32 %v739, 0.5
    %v841 = vmul.f32 %v402, 0.5
    %v842 = vmul.f32 %v404, 0.5
    %v843 = vmul.f32 %v515, 0.5
    %v844 = vmul.f32 %v517, 0.5
    %v845 = vmul.f32 %v628, 0.5
    %v846 = vmul.f32 %v630, 0.5
    %v847 = vmul.f32 %v741, 0.5
    %v848 = vmul.f32 %v743, 0.5
    %v849 = vmul.f32 %v408, 0.5
    %v850 = vmul.f32 %v410, 0.5
    %v851 = vmul.f32 %v521, 0.5
    %v852 = vmul.f32 %v523, 0.5
    %v853 = vmul.f32 %v634, 0.5
    %v854 = vmul.f32 %v636, 0.5
    %v855 = vmul.f32 %v747, 0.5
    %v856 = vmul.f32 %v749, 0.5
    %v857 = vmul.f32 %v412, 0.5
    %v858 = vmul.f32 %v414, 0.5
    %v859 = vmul.f32 %v525, 0.5
    %v860 = vmul.f32 %v527, 0.5
    %v861 = vmul.f32 %v638, 0.5
    %v862 = vmul.f32 %v640, 0.5
    %v863 = vmul.f32 %v751, 0.5
    %v864 = vmul.f32 %v753, 0.5
    %v865 = vmul.f32 %v418, 0.5
    %v866 = vmul.f32 %v420, 0.5
    %v867 = vmul.f32 %v531, 0.5
    %v868 = vmul.f32 %v533, 0.5
    %v869 = vmul.f32 %v644, 0.5
    %v870 = vmul.f32 %v646, 0.5
    %v871 = vmul.f32 %v757, 0.5
    %v872 = vmul.f32 %v759, 0.5
    %v873 = vmul.f32 %v422, 0.5
    %v874 = vmul.f32 %v424, 0.5
    %v875 = vmul.f32 %v535, 0.5
    %v876 = vmul.f32 %v537, 0.5
    %v877 = vmul.f32 %v648, 0.5
    %v878 = vmul.f32 %v650, 0.5
    %v879 = vmul.f32 %v761, 0.5
    %v880 = vmul.f32 %v763, 0.5
    %v881 = vmul.f32 %v428, 0.5
    %v882 = vmul.f32 %v430, 0.5
    %v883 = vmul.f32 %v541, 0.5
    %v884 = vmul.f32 %v543, 0.5
    %v885 = vmul.f32 %v654, 0.5
    %v886 = vmul.f32 %v656, 0.5
    %v887 = vmul.f32 %v767, 0.5
    %v888 = vmul.f32 %v769, 0.5
    %v889 = vmul.f32 %v432, 0.5
    %v890 = vmul.f32 %v434, 0.5
    %v891 = vmul.f32 %v545, 0.5
    %v892 = vmul.f32 %v547, 0.5
    %v893 = vmul.f32 %v658, 0.5
    %v894 = vmul.f32 %v660, 0.5
    %v895 = vmul.f32 %v771, 0.5
    %v896 = vmul.f32 %v773, 0.5
    %v897 = vmul.f32 %v438, 0.5
    %v898 = vmul.f32 %v440, 0.5
    %v899 = vmul.f32 %v551, 0.5
    %v900 = vmul.f32 %v553, 0.5
    %v901 = vmul.f32 %v664, 0.5
    %v902 = vmul.f32 %v666, 0.5
    %v903 = vmul.f32 %v777, 0.5
    %v904 = vmul.f32 %v779, 0.5
    %v905 = vmul.f32 %v442, 0.5
    %v906 = vmul.f32 %v444, 0.5
    %v907 = vmul.f32 %v555, 0.5
    %v908 = vmul.f32 %v557, 0.5
    %v909 = vmul.f32 %v668, 0.5
    %v910 = vmul.f32 %v670, 0.5
    %v911 = vmul.f32 %v781, 0.5
    %v912 = vmul.f32 %v783, 0.5
    %v913 = vmul.f32 %v368, 0.044715
    %v914 = vmul.f32 %v370, 0.044715
    %v915 = vmul.f32 %v481, 0.044715
    %v916 = vmul.f32 %v483, 0.044715
    %v917 = vmul.f32 %v594, 0.044715
    %v918 = vmul.f32 %v596, 0.044715
    %v919 = vmul.f32 %v707, 0.044715
    %v920 = vmul.f32 %v709, 0.044715
    %v921 = vmul.f32 %v372, 0.044715
    %v922 = vmul.f32 %v374, 0.044715
    %v923 = vmul.f32 %v485, 0.044715
    %v924 = vmul.f32 %v487, 0.044715
    %v925 = vmul.f32 %v598, 0.044715
    %v926 = vmul.f32 %v600, 0.044715
    %v927 = vmul.f32 %v711, 0.044715
    %v928 = vmul.f32 %v713, 0.044715
    %v929 = vmul.f32 %v378, 0.044715
    %v930 = vmul.f32 %v380, 0.044715
    %v931 = vmul.f32 %v491, 0.044715
    %v932 = vmul.f32 %v493, 0.044715
    %v933 = vmul.f32 %v604, 0.044715
    %v934 = vmul.f32 %v606, 0.044715
    %v935 = vmul.f32 %v717, 0.044715
    %v936 = vmul.f32 %v719, 0.044715
    %v937 = vmul.f32 %v382, 0.044715
    %v938 = vmul.f32 %v384, 0.044715
    %v939 = vmul.f32 %v495, 0.044715
    %v940 = vmul.f32 %v497, 0.044715
    %v941 = vmul.f32 %v608, 0.044715
    %v942 = vmul.f32 %v610, 0.044715
    %v943 = vmul.f32 %v721, 0.044715
    %v944 = vmul.f32 %v723, 0.044715
    %v945 = vmul.f32 %v388, 0.044715
    %v946 = vmul.f32 %v390, 0.044715
    %v947 = vmul.f32 %v501, 0.044715
    %v948 = vmul.f32 %v503, 0.044715
    %v949 = vmul.f32 %v614, 0.044715
    %v950 = vmul.f32 %v616, 0.044715
    %v951 = vmul.f32 %v727, 0.044715
    %v952 = vmul.f32 %v729, 0.044715
    %v953 = vmul.f32 %v392, 0.044715
    %v954 = vmul.f32 %v394, 0.044715
    %v955 = vmul.f32 %v505, 0.044715
    %v956 = vmul.f32 %v507, 0.044715
    %v957 = vmul.f32 %v618, 0.044715
    %v958 = vmul.f32 %v620, 0.044715
    %v959 = vmul.f32 %v731, 0.044715
    %v960 = vmul.f32 %v733, 0.044715
    %v961 = vmul.f32 %v398, 0.044715
    %v962 = vmul.f32 %v400, 0.044715
    %v963 = vmul.f32 %v511, 0.044715
    %v964 = vmul.f32 %v513, 0.044715
    %v965 = vmul.f32 %v624, 0.044715
    %v966 = vmul.f32 %v626, 0.044715
    %v967 = vmul.f32 %v737, 0.044715
    %v968 = vmul.f32 %v739, 0.044715
    %v969 = vmul.f32 %v402, 0.044715
    %v970 = vmul.f32 %v404, 0.044715
    %v971 = vmul.f32 %v515, 0.044715
    %v972 = vmul.f32 %v517, 0.044715
    %v973 = vmul.f32 %v628, 0.044715
    %v974 = vmul.f32 %v630, 0.044715
    %v975 = vmul.f32 %v741, 0.044715
    %v976 = vmul.f32 %v743, 0.044715
    %v977 = vmul.f32 %v408, 0.044715
    %v978 = vmul.f32 %v410, 0.044715
    %v979 = vmul.f32 %v521, 0.044715
    %v980 = vmul.f32 %v523, 0.044715
    %v981 = vmul.f32 %v634, 0.044715
    %v982 = vmul.f32 %v636, 0.044715
    %v983 = vmul.f32 %v747, 0.044715
    %v984 = vmul.f32 %v749, 0.044715
    %v985 = vmul.f32 %v412, 0.044715
    %v986 = vmul.f32 %v414, 0.044715
    %v987 = vmul.f32 %v525, 0.044715
    %v988 = vmul.f32 %v527, 0.044715
    %v989 = vmul.f32 %v638, 0.044715
    %v990 = vmul.f32 %v640, 0.044715
    %v991 = vmul.f32 %v751, 0.044715
    %v992 = vmul.f32 %v753, 0.044715
    %v993 = vmul.f32 %v418, 0.044715
    %v994 = vmul.f32 %v420, 0.044715
    %v995 = vmul.f32 %v531, 0.044715
    %v996 = vmul.f32 %v533, 0.044715
    %v997 = vmul.f32 %v644, 0.044715
    %v998 = vmul.f32 %v646, 0.044715
    %v999 = vmul.f32 %v757, 0.044715
    %v1000 = vmul.f32 %v759, 0.044715
    %v1001 = vmul.f32 %v422, 0.044715
    %v1002 = vmul.f32 %v424, 0.044715
    %v1003 = vmul.f32 %v535, 0.044715
    %v1004 = vmul.f32 %v537, 0.044715
    %v1005 = vmul.f32 %v648, 0.044715
    %v1006 = vmul.f32 %v650, 0.044715
    %v1007 = vmul.f32 %v761, 0.044715
    %v1008 = vmul.f32 %v763, 0.044715
    %v1009 = vmul.f32 %v428, 0.044715
    %v1010 = vmul.f32 %v430, 0.044715
    %v1011 = vmul.f32 %v541, 0.044715
    %v1012 = vmul.f32 %v543, 0.044715
    %v1013 = vmul.f32 %v654, 0.044715
    %v1014 = vmul.f32 %v656, 0.044715
    %v1015 = vmul.f32 %v767, 0.044715
    %v1016 = vmul.f32 %v769, 0.044715
    %v1017 = vmul.f32 %v432, 0.044715
    %v1018 = vmul.f32 %v434, 0.044715
    %v1019 = vmul.f32 %v545, 0.044715
    %v1020 = vmul.f32 %v547, 0.044715
    %v1021 = vmul.f32 %v658, 0.044715
    %v1022 = vmul.f32 %v660, 0.044715
    %v1023 = vmul.f32 %v771, 0.044715
    %v1024 = vmul.f32 %v773, 0.044715
    %v1025 = vmul.f32 %v438, 0.044715
    %v1026 = vmul.f32 %v440, 0.044715
    %v1027 = vmul.f32 %v551, 0.044715
    %v1028 = vmul.f32 %v553, 0.044715
    %v1029 = vmul.f32 %v664, 0.044715
    %v1030 = vmul.f32 %v666, 0.044715
    %v1031 = vmul.f32 %v777, 0.044715
    %v1032 = vmul.f32 %v779, 0.044715
    %v1033 = vmul.f32 %v442, 0.044715
    %v1034 = vmul.f32 %v444, 0.044715
    %v1035 = vmul.f32 %v555, 0.044715
    %v1036 = vmul.f32 %v557, 0.044715
    %v1037 = vmul.f32 %v668, 0.044715
    %v1038 = vmul.f32 %v670, 0.044715
    %v1039 = vmul.f32 %v781, 0.044715
    %v1040 = vmul.f32 %v783, 0.044715
    %v1041 = vmul.f32 %v913, %v368
    %v1042 = vmul.f32 %v914, %v370
    %v1043 = vmul.f32 %v915, %v481
    %v1044 = vmul.f32 %v916, %v483
    %v1045 = vmul.f32 %v917, %v594
    %v1046 = vmul.f32 %v918, %v596
    %v1047 = vmul.f32 %v919, %v707
    %v1048 = vmul.f32 %v920, %v709
    %v1049 = vmul.f32 %v921, %v372
    %v1050 = vmul.f32 %v922, %v374
    %v1051 = vmul.f32 %v923, %v485
    %v1052 = vmul.f32 %v924, %v487
    %v1053 = vmul.f32 %v925, %v598
    %v1054 = vmul.f32 %v926, %v600
    %v1055 = vmul.f32 %v927, %v711
    %v1056 = vmul.f32 %v928, %v713
    %v1057 = vmul.f32 %v929, %v378
    %v1058 = vmul.f32 %v930, %v380
    %v1059 = vmul.f32 %v931, %v491
    %v1060 = vmul.f32 %v932, %v493
    %v1061 = vmul.f32 %v933, %v604
    %v1062 = vmul.f32 %v934, %v606
    %v1063 = vmul.f32 %v935, %v717
    %v1064 = vmul.f32 %v936, %v719
    %v1065 = vmul.f32 %v937, %v382
    %v1066 = vmul.f32 %v938, %v384
    %v1067 = vmul.f32 %v939, %v495
    %v1068 = vmul.f32 %v940, %v497
    %v1069 = vmul.f32 %v941, %v608
    %v1070 = vmul.f32 %v942, %v610
    %v1071 = vmul.f32 %v943, %v721
    %v1072 = vmul.f32 %v944, %v723
    %v1073 = vmul.f32 %v945, %v388
    %v1074 = vmul.f32 %v946, %v390
    %v1075 = vmul.f32 %v947, %v501
    %v1076 = vmul.f32 %v948, %v503
    %v1077 = vmul.f32 %v949, %v614
    %v1078 = vmul.f32 %v950, %v616
    %v1079 = vmul.f32 %v951, %v727
    %v1080 = vmul.f32 %v952, %v729
    %v1081 = vmul.f32 %v953, %v392
    %v1082 = vmul.f32 %v954, %v394
    %v1083 = vmul.f32 %v955, %v505
    %v1084 = vmul.f32 %v956, %v507
    %v1085 = vmul.f32 %v957, %v618
    %v1086 = vmul.f32 %v958, %v620
    %v1087 = vmul.f32 %v959, %v731
    %v1088 = vmul.f32 %v960, %v733
    %v1089 = vmul.f32 %v961, %v398
    %v1090 = vmul.f32 %v962, %v400
    %v1091 = vmul.f32 %v963, %v511
    %v1092 = vmul.f32 %v964, %v513
    %v1093 = vmul.f32 %v965, %v624
    %v1094 = vmul.f32 %v966, %v626
    %v1095 = vmul.f32 %v967, %v737
    %v1096 = vmul.f32 %v968, %v739
    %v1097 = vmul.f32 %v969, %v402
    %v1098 = vmul.f32 %v970, %v404
    %v1099 = vmul.f32 %v971, %v515
    %v1100 = vmul.f32 %v972, %v517
    %v1101 = vmul.f32 %v973, %v628
    %v1102 = vmul.f32 %v974, %v630
    %v1103 = vmul.f32 %v975, %v741
    %v1104 = vmul.f32 %v976, %v743
    %v1105 = vmul.f32 %v977, %v408
    %v1106 = vmul.f32 %v978, %v410
    %v1107 = vmul.f32 %v979, %v521
    %v1108 = vmul.f32 %v980, %v523
    %v1109 = vmul.f32 %v981, %v634
    %v1110 = vmul.f32 %v982, %v636
    %v1111 = vmul.f32 %v983, %v747
    %v1112 = vmul.f32 %v984, %v749
    %v1113 = vmul.f32 %v985, %v412
    %v1114 = vmul.f32 %v986, %v414
    %v1115 = vmul.f32 %v987, %v525
    %v1116 = vmul.f32 %v988, %v527
    %v1117 = vmul.f32 %v989, %v638
    %v1118 = vmul.f32 %v990, %v640
    %v1119 = vmul.f32 %v991, %v751
    %v1120 = vmul.f32 %v992, %v753
    %v1121 = vmul.f32 %v993, %v418
    %v1122 = vmul.f32 %v994, %v420
    %v1123 = vmul.f32 %v995, %v531
    %v1124 = vmul.f32 %v996, %v533
    %v1125 = vmul.f32 %v997, %v644
    %v1126 = vmul.f32 %v998, %v646
    %v1127 = vmul.f32 %v999, %v757
    %v1128 = vmul.f32 %v1000, %v759
    %v1129 = vmul.f32 %v1001, %v422
    %v1130 = vmul.f32 %v1002, %v424
    %v1131 = vmul.f32 %v1003, %v535
    %v1132 = vmul.f32 %v1004, %v537
    %v1133 = vmul.f32 %v1005, %v648
    %v1134 = vmul.f32 %v1006, %v650
    %v1135 = vmul.f32 %v1007, %v761
    %v1136 = vmul.f32 %v1008, %v763
    %v1137 = vmul.f32 %v1009, %v428
    %v1138 = vmul.f32 %v1010, %v430
    %v1139 = vmul.f32 %v1011, %v541
    %v1140 = vmul.f32 %v1012, %v543
    %v1141 = vmul.f32 %v1013, %v654
    %v1142 = vmul.f32 %v1014, %v656
    %v1143 = vmul.f32 %v1015, %v767
    %v1144 = vmul.f32 %v1016, %v769
    %v1145 = vmul.f32 %v1017, %v432
    %v1146 = vmul.f32 %v1018, %v434
    %v1147 = vmul.f32 %v1019, %v545
    %v1148 = vmul.f32 %v1020, %v547
    %v1149 = vmul.f32 %v1021, %v658
    %v1150 = vmul.f32 %v1022, %v660
    %v1151 = vmul.f32 %v1023, %v771
    %v1152 = vmul.f32 %v1024, %v773
    %v1153 = vmul.f32 %v1025, %v438
    %v1154 = vmul.f32 %v1026, %v440
    %v1155 = vmul.f32 %v1027, %v551
    %v1156 = vmul.f32 %v1028, %v553
    %v1157 = vmul.f32 %v1029, %v664
    %v1158 = vmul.f32 %v1030, %v666
    %v1159 = vmul.f32 %v1031, %v777
    %v1160 = vmul.f32 %v1032, %v779
    %v1161 = vmul.f32 %v1033, %v442
    %v1162 = vmul.f32 %v1034, %v444
    %v1163 = vmul.f32 %v1035, %v555
    %v1164 = vmul.f32 %v1036, %v557
    %v1165 = vmul.f32 %v1037, %v668
    %v1166 = vmul.f32 %v1038, %v670
    %v1167 = vmul.f32 %v1039, %v781
    %v1168 = vmul.f32 %v1040, %v783
    %v1169 = vmul.f32 %v1041, %v368
    %v1170 = vmul.f32 %v1042, %v370
    %v1171 = vmul.f32 %v1043, %v481
    %v1172 = vmul.f32 %v1044, %v483
    %v1173 = vmul.f32 %v1045, %v594
    %v1174 = vmul.f32 %v1046, %v596
    %v1175 = vmul.f32 %v1047, %v707
    %v1176 = vmul.f32 %v1048, %v709
    %v1177 = vmul.f32 %v1049, %v372
    %v1178 = vmul.f32 %v1050, %v374
    %v1179 = vmul.f32 %v1051, %v485
    %v1180 = vmul.f32 %v1052, %v487
    %v1181 = vmul.f32 %v1053, %v598
    %v1182 = vmul.f32 %v1054, %v600
    %v1183 = vmul.f32 %v1055, %v711
    %v1184 = vmul.f32 %v1056, %v713
    %v1185 = vmul.f32 %v1057, %v378
    %v1186 = vmul.f32 %v1058, %v380
    %v1187 = vmul.f32 %v1059, %v491
    %v1188 = vmul.f32 %v1060, %v493
    %v1189 = vmul.f32 %v1061, %v604
    %v1190 = vmul.f32 %v1062, %v606
    %v1191 = vmul.f32 %v1063, %v717
    %v1192 = vmul.f32 %v1064, %v719
    %v1193 = vmul.f32 %v1065, %v382
    %v1194 = vmul.f32 %v1066, %v384
    %v1195 = vmul.f32 %v1067, %v495
    %v1196 = vmul.f32 %v1068, %v497
    %v1197 = vmul.f32 %v1069, %v608
    %v1198 = vmul.f32 %v1070, %v610
    %v1199 = vmul.f32 %v1071, %v721
    %v1200 = vmul.f32 %v1072, %v723
    %v1201 = vmul.f32 %v1073, %v388
    %v1202 = vmul.f32 %v1074, %v390
    %v1203 = vmul.f32 %v1075, %v501
    %v1204 = vmul.f32 %v1076, %v503
    %v1205 = vmul.f32 %v1077, %v614
    %v1206 = vmul.f32 %v1078, %v616
    %v1207 = vmul.f32 %v1079, %v727
    %v1208 = vmul.f32 %v1080, %v729
    %v1209 = vmul.f32 %v1081, %v392
    %v1210 = vmul.f32 %v1082, %v394
    %v1211 = vmul.f32 %v1083, %v505
    %v1212 = vmul.f32 %v1084, %v507
    %v1213 = vmul.f32 %v1085, %v618
    %v1214 = vmul.f32 %v1086, %v620
    %v1215 = vmul.f32 %v1087, %v731
    %v1216 = vmul.f32 %v1088, %v733
    %v1217 = vmul.f32 %v1089, %v398
    %v1218 = vmul.f32 %v1090, %v400
    %v1219 = vmul.f32 %v1091, %v511
    %v1220 = vmul.f32 %v1092, %v513
    %v1221 = vmul.f32 %v1093, %v624
    %v1222 = vmul.f32 %v1094, %v626
    %v1223 = vmul.f32 %v1095, %v737
    %v1224 = vmul.f32 %v1096, %v739
    %v1225 = vmul.f32 %v1097, %v402
    %v1226 = vmul.f32 %v1098, %v404
    %v1227 = vmul.f32 %v1099, %v515
    %v1228 = vmul.f32 %v1100, %v517
    %v1229 = vmul.f32 %v1101, %v628
    %v1230 = vmul.f32 %v1102, %v630
    %v1231 = vmul.f32 %v1103, %v741
    %v1232 = vmul.f32 %v1104, %v743
    %v1233 = vmul.f32 %v1105, %v408
    %v1234 = vmul.f32 %v1106, %v410
    %v1235 = vmul.f32 %v1107, %v521
    %v1236 = vmul.f32 %v1108, %v523
    %v1237 = vmul.f32 %v1109, %v634
    %v1238 = vmul.f32 %v1110, %v636
    %v1239 = vmul.f32 %v1111, %v747
    %v1240 = vmul.f32 %v1112, %v749
    %v1241 = vmul.f32 %v1113, %v412
    %v1242 = vmul.f32 %v1114, %v414
    %v1243 = vmul.f32 %v1115, %v525
    %v1244 = vmul.f32 %v1116, %v527
    %v1245 = vmul.f32 %v1117, %v638
    %v1246 = vmul.f32 %v1118, %v640
    %v1247 = vmul.f32 %v1119, %v751
    %v1248 = vmul.f32 %v1120, %v753
    %v1249 = vmul.f32 %v1121, %v418
    %v1250 = vmul.f32 %v1122, %v420
    %v1251 = vmul.f32 %v1123, %v531
    %v1252 = vmul.f32 %v1124, %v533
    %v1253 = vmul.f32 %v1125, %v644
    %v1254 = vmul.f32 %v1126, %v646
    %v1255 = vmul.f32 %v1127, %v757
    %v1256 = vmul.f32 %v1128, %v759
    %v1257 = vmul.f32 %v1129, %v422
    %v1258 = vmul.f32 %v1130, %v424
    %v1259 = vmul.f32 %v1131, %v535
    %v1260 = vmul.f32 %v1132, %v537
    %v1261 = vmul.f32 %v1133, %v648
    %v1262 = vmul.f32 %v1134, %v650
    %v1263 = vmul.f32 %v1135, %v761
    %v1264 = vmul.f32 %v1136, %v763
    %v1265 = vmul.f32 %v1137, %v428
    %v1266 = vmul.f32 %v1138, %v430
    %v1267 = vmul.f32 %v1139, %v541
    %v1268 = vmul.f32 %v1140, %v543
    %v1269 = vmul.f32 %v1141, %v654
    %v1270 = vmul.f32 %v1142, %v656
    %v1271 = vmul.f32 %v1143, %v767
    %v1272 = vmul.f32 %v1144, %v769
    %v1273 = vmul.f32 %v1145, %v432
    %v1274 = vmul.f32 %v1146, %v434
    %v1275 = vmul.f32 %v1147, %v545
    %v1276 = vmul.f32 %v1148, %v547
    %v1277 = vmul.f32 %v1149, %v658
    %v1278 = vmul.f32 %v1150, %v660
    %v1279 = vmul.f32 %v1151, %v771
    %v1280 = vmul.f32 %v1152, %v773
    %v1281 = vmul.f32 %v1153, %v438
    %v1282 = vmul.f32 %v1154, %v440
    %v1283 = vmul.f32 %v1155, %v551
    %v1284 = vmul.f32 %v1156, %v553
    %v1285 = vmul.f32 %v1157, %v664
    %v1286 = vmul.f32 %v1158, %v666
    %v1287 = vmul.f32 %v1159, %v777
    %v1288 = vmul.f32 %v1160, %v779
    %v1289 = vmul.f32 %v1161, %v442
    %v1290 = vmul.f32 %v1162, %v444
    %v1291 = vmul.f32 %v1163, %v555
    %v1292 = vmul.f32 %v1164, %v557
    %v1293 = vmul.f32 %v1165, %v668
    %v1294 = vmul.f32 %v1166, %v670
    %v1295 = vmul.f32 %v1167, %v781
    %v1296 = vmul.f32 %v1168, %v783
    %v1297 = vadd.f32 %v368, %v1169
    %v1298 = vadd.f32 %v370, %v1170
    %v1299 = vadd.f32 %v481, %v1171
    %v1300 = vadd.f32 %v483, %v1172
    %v1301 = vadd.f32 %v594, %v1173
    %v1302 = vadd.f32 %v596, %v1174
    %v1303 = vadd.f32 %v707, %v1175
    %v1304 = vadd.f32 %v709, %v1176
    %v1305 = vadd.f32 %v372, %v1177
    %v1306 = vadd.f32 %v374, %v1178
    %v1307 = vadd.f32 %v485, %v1179
    %v1308 = vadd.f32 %v487, %v1180
    %v1309 = vadd.f32 %v598, %v1181
    %v1310 = vadd.f32 %v600, %v1182
    %v1311 = vadd.f32 %v711, %v1183
    %v1312 = vadd.f32 %v713, %v1184
    %v1313 = vadd.f32 %v378, %v1185
    %v1314 = vadd.f32 %v380, %v1186
    %v1315 = vadd.f32 %v491, %v1187
    %v1316 = vadd.f32 %v493, %v1188
    %v1317 = vadd.f32 %v604, %v1189
    %v1318 = vadd.f32 %v606, %v1190
    %v1319 = vadd.f32 %v717, %v1191
    %v1320 = vadd.f32 %v719, %v1192
    %v1321 = vadd.f32 %v382, %v1193
    %v1322 = vadd.f32 %v384, %v1194
    %v1323 = vadd.f32 %v495, %v1195
    %v1324 = vadd.f32 %v497, %v1196
    %v1325 = vadd.f32 %v608, %v1197
    %v1326 = vadd.f32 %v610, %v1198
    %v1327 = vadd.f32 %v721, %v1199
    %v1328 = vadd.f32 %v723, %v1200
    %v1329 = vadd.f32 %v388, %v1201
    %v1330 = vadd.f32 %v390, %v1202
    %v1331 = vadd.f32 %v501, %v1203
    %v1332 = vadd.f32 %v503, %v1204
    %v1333 = vadd.f32 %v614, %v1205
    %v1334 = vadd.f32 %v616, %v1206
    %v1335 = vadd.f32 %v727, %v1207
    %v1336 = vadd.f32 %v729, %v1208
    %v1337 = vadd.f32 %v392, %v1209
    %v1338 = vadd.f32 %v394, %v1210
    %v1339 = vadd.f32 %v505, %v1211
    %v1340 = vadd.f32 %v507, %v1212
    %v1341 = vadd.f32 %v618, %v1213
    %v1342 = vadd.f32 %v620, %v1214
    %v1343 = vadd.f32 %v731, %v1215
    %v1344 = vadd.f32 %v733, %v1216
    %v1345 = vadd.f32 %v398, %v1217
    %v1346 = vadd.f32 %v400, %v1218
    %v1347 = vadd.f32 %v511, %v1219
    %v1348 = vadd.f32 %v513, %v1220
    %v1349 = vadd.f32 %v624, %v1221
    %v1350 = vadd.f32 %v626, %v1222
    %v1351 = vadd.f32 %v737, %v1223
    %v1352 = vadd.f32 %v739, %v1224
    %v1353 = vadd.f32 %v402, %v1225
    %v1354 = vadd.f32 %v404, %v1226
    %v1355 = vadd.f32 %v515, %v1227
    %v1356 = vadd.f32 %v517, %v1228
    %v1357 = vadd.f32 %v628, %v1229
    %v1358 = vadd.f32 %v630, %v1230
    %v1359 = vadd.f32 %v741, %v1231
    %v1360 = vadd.f32 %v743, %v1232
    %v1361 = vadd.f32 %v408, %v1233
    %v1362 = vadd.f32 %v410, %v1234
    %v1363 = vadd.f32 %v521, %v1235
    %v1364 = vadd.f32 %v523, %v1236
    %v1365 = vadd.f32 %v634, %v1237
    %v1366 = vadd.f32 %v636, %v1238
    %v1367 = vadd.f32 %v747, %v1239
    %v1368 = vadd.f32 %v749, %v1240
    %v1369 = vadd.f32 %v412, %v1241
    %v1370 = vadd.f32 %v414, %v1242
    %v1371 = vadd.f32 %v525, %v1243
    %v1372 = vadd.f32 %v527, %v1244
    %v1373 = vadd.f32 %v638, %v1245
    %v1374 = vadd.f32 %v640, %v1246
    %v1375 = vadd.f32 %v751, %v1247
    %v1376 = vadd.f32 %v753, %v1248
    %v1377 = vadd.f32 %v418, %v1249
    %v1378 = vadd.f32 %v420, %v1250
    %v1379 = vadd.f32 %v531, %v1251
    %v1380 = vadd.f32 %v533, %v1252
    %v1381 = vadd.f32 %v644, %v1253
    %v1382 = vadd.f32 %v646, %v1254
    %v1383 = vadd.f32 %v757, %v1255
    %v1384 = vadd.f32 %v759, %v1256
    %v1385 = vadd.f32 %v422, %v1257
    %v1386 = vadd.f32 %v424, %v1258
    %v1387 = vadd.f32 %v535, %v1259
    %v1388 = vadd.f32 %v537, %v1260
    %v1389 = vadd.f32 %v648, %v1261
    %v1390 = vadd.f32 %v650, %v1262
    %v1391 = vadd.f32 %v761, %v1263
    %v1392 = vadd.f32 %v763, %v1264
    %v1393 = vadd.f32 %v428, %v1265
    %v1394 = vadd.f32 %v430, %v1266
    %v1395 = vadd.f32 %v541, %v1267
    %v1396 = vadd.f32 %v543, %v1268
    %v1397 = vadd.f32 %v654, %v1269
    %v1398 = vadd.f32 %v656, %v1270
    %v1399 = vadd.f32 %v767, %v1271
    %v1400 = vadd.f32 %v769, %v1272
    %v1401 = vadd.f32 %v432, %v1273
    %v1402 = vadd.f32 %v434, %v1274
    %v1403 = vadd.f32 %v545, %v1275
    %v1404 = vadd.f32 %v547, %v1276
    %v1405 = vadd.f32 %v658, %v1277
    %v1406 = vadd.f32 %v660, %v1278
    %v1407 = vadd.f32 %v771, %v1279
    %v1408 = vadd.f32 %v773, %v1280
    %v1409 = vadd.f32 %v438, %v1281
    %v1410 = vadd.f32 %v440, %v1282
    %v1411 = vadd.f32 %v551, %v1283
    %v1412 = vadd.f32 %v553, %v1284
    %v1413 = vadd.f32 %v664, %v1285
    %v1414 = vadd.f32 %v666, %v1286
    %v1415 = vadd.f32 %v777, %v1287
    %v1416 = vadd.f32 %v779, %v1288
    %v1417 = vadd.f32 %v442, %v1289
    %v1418 = vadd.f32 %v444, %v1290
    %v1419 = vadd.f32 %v555, %v1291
    %v1420 = vadd.f32 %v557, %v1292
    %v1421 = vadd.f32 %v668, %v1293
    %v1422 = vadd.f32 %v670, %v1294
    %v1423 = vadd.f32 %v781, %v1295
    %v1424 = vadd.f32 %v783, %v1296
    %v1425 = vmul.f32 %v1297, 0.7978846
    %v1426 = vmul.f32 %v1298, 0.7978846
    %v1427 = vmul.f32 %v1299, 0.7978846
    %v1428 = vmul.f32 %v1300, 0.7978846
    %v1429 = vmul.f32 %v1301, 0.7978846
    %v1430 = vmul.f32 %v1302, 0.7978846
    %v1431 = vmul.f32 %v1303, 0.7978846
    %v1432 = vmul.f32 %v1304, 0.7978846
    %v1433 = vmul.f32 %v1305, 0.7978846
    %v1434 = vmul.f32 %v1306, 0.7978846
    %v1435 = vmul.f32 %v1307, 0.7978846
    %v1436 = vmul.f32 %v1308, 0.7978846
    %v1437 = vmul.f32 %v1309, 0.7978846
    %v1438 = vmul.f32 %v1310, 0.7978846
    %v1439 = vmul.f32 %v1311, 0.7978846
    %v1440 = vmul.f32 %v1312, 0.7978846
    %v1441 = vmul.f32 %v1313, 0.7978846
    %v1442 = vmul.f32 %v1314, 0.7978846
    %v1443 = vmul.f32 %v1315, 0.7978846
    %v1444 = vmul.f32 %v1316, 0.7978846
    %v1445 = vmul.f32 %v1317, 0.7978846
    %v1446 = vmul.f32 %v1318, 0.7978846
    %v1447 = vmul.f32 %v1319, 0.7978846
    %v1448 = vmul.f32 %v1320, 0.7978846
    %v1449 = vmul.f32 %v1321, 0.7978846
    %v1450 = vmul.f32 %v1322, 0.7978846
    %v1451 = vmul.f32 %v1323, 0.7978846
    %v1452 = vmul.f32 %v1324, 0.7978846
    %v1453 = vmul.f32 %v1325, 0.7978846
    %v1454 = vmul.f32 %v1326, 0.7978846
    %v1455 = vmul.f32 %v1327, 0.7978846
    %v1456 = vmul.f32 %v1328, 0.7978846
    %v1457 = vmul.f32 %v1329, 0.7978846
    %v1458 = vmul.f32 %v1330, 0.7978846
    %v1459 = vmul.f32 %v1331, 0.7978846
    %v1460 = vmul.f32 %v1332, 0.7978846
    %v1461 = vmul.f32 %v1333, 0.7978846
    %v1462 = vmul.f32 %v1334, 0.7978846
    %v1463 = vmul.f32 %v1335, 0.7978846
    %v1464 = vmul.f32 %v1336, 0.7978846
    %v1465 = vmul.f32 %v1337, 0.7978846
    %v1466 = vmul.f32 %v1338, 0.7978846
    %v1467 = vmul.f32 %v1339, 0.7978846
    %v1468 = vmul.f32 %v1340, 0.7978846
    %v1469 = vmul.f32 %v1341, 0.7978846
    %v1470 = vmul.f32 %v1342, 0.7978846
    %v1471 = vmul.f32 %v1343, 0.7978846
    %v1472 = vmul.f32 %v1344, 0.7978846
    %v1473 = vmul.f32 %v1345, 0.7978846
    %v1474 = vmul.f32 %v1346, 0.7978846
    %v1475 = vmul.f32 %v1347, 0.7978846
    %v1476 = vmul.f32 %v1348, 0.7978846
    %v1477 = vmul.f32 %v1349, 0.7978846
    %v1478 = vmul.f32 %v1350, 0.7978846
    %v1479 = vmul.f32 %v1351, 0.7978846
    %v1480 = vmul.f32 %v1352, 0.7978846
    %v1481 = vmul.f32 %v1353, 0.7978846
    %v1482 = vmul.f32 %v1354, 0.7978846
    %v1483 = vmul.f32 %v1355, 0.7978846
    %v1484 = vmul.f32 %v1356, 0.7978846
    %v1485 = vmul.f32 %v1357, 0.7978846
    %v1486 = vmul.f32 %v1358, 0.7978846
    %v1487 = vmul.f32 %v1359, 0.7978846
    %v1488 = vmul.f32 %v1360, 0.7978846
    %v1489 = vmul.f32 %v1361, 0.7978846
    %v1490 = vmul.f32 %v1362, 0.7978846
    %v1491 = vmul.f32 %v1363, 0.7978846
    %v1492 = vmul.f32 %v1364, 0.7978846
    %v1493 = vmul.f32 %v1365, 0.7978846
    %v1494 = vmul.f32 %v1366, 0.7978846
    %v1495 = vmul.f32 %v1367, 0.7978846
    %v1496 = vmul.f32 %v1368, 0.7978846
    %v1497 = vmul.f32 %v1369, 0.7978846
    %v1498 = vmul.f32 %v1370, 0.7978846
    %v1499 = vmul.f32 %v1371, 0.7978846
    %v1500 = vmul.f32 %v1372, 0.7978846
    %v1501 = vmul.f32 %v1373, 0.7978846
    %v1502 = vmul.f32 %v1374, 0.7978846
    %v1503 = vmul.f32 %v1375, 0.7978846
    %v1504 = vmul.f32 %v1376, 0.7978846
    %v1505 = vmul.f32 %v1377, 0.7978846
    %v1506 = vmul.f32 %v1378, 0.7978846
    %v1507 = vmul.f32 %v1379, 0.7978846
    %v1508 = vmul.f32 %v1380, 0.7978846
    %v1509 = vmul.f32 %v1381, 0.7978846
    %v1510 = vmul.f32 %v1382, 0.7978846
    %v1511 = vmul.f32 %v1383, 0.7978846
    %v1512 = vmul.f32 %v1384, 0.7978846
    %v1513 = vmul.f32 %v1385, 0.7978846
    %v1514 = vmul.f32 %v1386, 0.7978846
    %v1515 = vmul.f32 %v1387, 0.7978846
    %v1516 = vmul.f32 %v1388, 0.7978846
    %v1517 = vmul.f32 %v1389, 0.7978846
    %v1518 = vmul.f32 %v1390, 0.7978846
    %v1519 = vmul.f32 %v1391, 0.7978846
    %v1520 = vmul.f32 %v1392, 0.7978846
    %v1521 = vmul.f32 %v1393, 0.7978846
    %v1522 = vmul.f32 %v1394, 0.7978846
    %v1523 = vmul.f32 %v1395, 0.7978846
    %v1524 = vmul.f32 %v1396, 0.7978846
    %v1525 = vmul.f32 %v1397, 0.7978846
    %v1526 = vmul.f32 %v1398, 0.7978846
    %v1527 = vmul.f32 %v1399, 0.7978846
    %v1528 = vmul.f32 %v1400, 0.7978846
    %v1529 = vmul.f32 %v1401, 0.7978846
    %v1530 = vmul.f32 %v1402, 0.7978846
    %v1531 = vmul.f32 %v1403, 0.7978846
    %v1532 = vmul.f32 %v1404, 0.7978846
    %v1533 = vmul.f32 %v1405, 0.7978846
    %v1534 = vmul.f32 %v1406, 0.7978846
    %v1535 = vmul.f32 %v1407, 0.7978846
    %v1536 = vmul.f32 %v1408, 0.7978846
    %v1537 = vmul.f32 %v1409, 0.7978846
    %v1538 = vmul.f32 %v1410, 0.7978846
    %v1539 = vmul.f32 %v1411, 0.7978846
    %v1540 = vmul.f32 %v1412, 0.7978846
    %v1541 = vmul.f32 %v1413, 0.7978846
    %v1542 = vmul.f32 %v1414, 0.7978846
    %v1543 = vmul.f32 %v1415, 0.7978846
    %v1544 = vmul.f32 %v1416, 0.7978846
    %v1545 = vmul.f32 %v1417, 0.7978846
    %v1546 = vmul.f32 %v1418, 0.7978846
    %v1547 = vmul.f32 %v1419, 0.7978846
    %v1548 = vmul.f32 %v1420, 0.7978846
    %v1549 = vmul.f32 %v1421, 0.7978846
    %v1550 = vmul.f32 %v1422, 0.7978846
    %v1551 = vmul.f32 %v1423, 0.7978846
    %v1552 = vmul.f32 %v1424, 0.7978846
    %v1553 = vtanh.pop %v1425
    %v1554 = vtanh.pop %v1426
    %v1555 = vtanh.pop %v1427
    %v1556 = vtanh.pop %v1428
    %v1557 = vtanh.pop %v1429
    %v1558 = vtanh.pop %v1430
    %v1559 = vtanh.pop %v1431
    %v1560 = vtanh.pop %v1432
    %v1561 = vtanh.pop %v1433
    %v1562 = vtanh.pop %v1434
    %v1563 = vtanh.pop %v1435
    %v1564 = vtanh.pop %v1436
    %v1565 = vtanh.pop %v1437
    %v1566 = vtanh.pop %v1438
    %v1567 = vtanh.pop %v1439
    %v1568 = vtanh.pop %v1440
    %v1569 = vtanh.pop %v1441
    %v1570 = vtanh.pop %v1442
    %v1571 = vtanh.pop %v1443
    %v1572 = vtanh.pop %v1444
    %v1573 = vtanh.pop %v1445
    %v1574 = vtanh.pop %v1446
    %v1575 = vtanh.pop %v1447
    %v1576 = vtanh.pop %v1448
    %v1577 = vtanh.pop %v1449
    %v1578 = vtanh.pop %v1450
    %v1579 = vtanh.pop %v1451
    %v1580 = vtanh.pop %v1452
    %v1581 = vtanh.pop %v1453
    %v1582 = vtanh.pop %v1454
    %v1583 = vtanh.pop %v1455
    %v1584 = vtanh.pop %v1456
    %v1585 = vtanh.pop %v1457
    %v1586 = vtanh.pop %v1458
    %v1587 = vtanh.pop %v1459
    %v1588 = vtanh.pop %v1460
    %v1589 = vtanh.pop %v1461
    %v1590 = vtanh.pop %v1462
    %v1591 = vtanh.pop %v1463
    %v1592 = vtanh.pop %v1464
    %v1593 = vtanh.pop %v1465
    %v1594 = vtanh.pop %v1466
    %v1595 = vtanh.pop %v1467
    %v1596 = vtanh.pop %v1468
    %v1597 = vtanh.pop %v1469
    %v1598 = vtanh.pop %v1470
    %v1599 = vtanh.pop %v1471
    %v1600 = vtanh.pop %v1472
    %v1601 = vtanh.pop %v1473
    %v1602 = vtanh.pop %v1474
    %v1603 = vtanh.pop %v1475
    %v1604 = vtanh.pop %v1476
    %v1605 = vtanh.pop %v1477
    %v1606 = vtanh.pop %v1478
    %v1607 = vtanh.pop %v1479
    %v1608 = vtanh.pop %v1480
    %v1609 = vtanh.pop %v1481
    %v1610 = vtanh.pop %v1482
    %v1611 = vtanh.pop %v1483
    %v1612 = vtanh.pop %v1484
    %v1613 = vtanh.pop %v1485
    %v1614 = vtanh.pop %v1486
    %v1615 = vtanh.pop %v1487
    %v1616 = vtanh.pop %v1488
    %v1617 = vtanh.pop %v1489
    %v1618 = vtanh.pop %v1490
    %v1619 = vtanh.pop %v1491
    %v1620 = vtanh.pop %v1492
    %v1621 = vtanh.pop %v1493
    %v1622 = vtanh.pop %v1494
    %v1623 = vtanh.pop %v1495
    %v1624 = vtanh.pop %v1496
    %v1625 = vtanh.pop %v1497
    %v1626 = vtanh.pop %v1498
    %v1627 = vtanh.pop %v1499
    %v1628 = vtanh.pop %v1500
    %v1629 = vtanh.pop %v1501
    %v1630 = vtanh.pop %v1502
    %v1631 = vtanh.pop %v1503
    %v1632 = vtanh.pop %v1504
    %v1633 = vtanh.pop %v1505
    %v1634 = vtanh.pop %v1506
    %v1635 = vtanh.pop %v1507
    %v1636 = vtanh.pop %v1508
    %v1637 = vtanh.pop %v1509
    %v1638 = vtanh.pop %v1510
    %v1639 = vtanh.pop %v1511
    %v1640 = vtanh.pop %v1512
    %v1641 = vtanh.pop %v1513
    %v1642 = vtanh.pop %v1514
    %v1643 = vtanh.pop %v1515
    %v1644 = vtanh.pop %v1516
    %v1645 = vtanh.pop %v1517
    %v1646 = vtanh.pop %v1518
    %v1647 = vtanh.pop %v1519
    %v1648 = vtanh.pop %v1520
    %v1649 = vtanh.pop %v1521
    %v1650 = vtanh.pop %v1522
    %v1651 = vtanh.pop %v1523
    %v1652 = vtanh.pop %v1524
    %v1653 = vtanh.pop %v1525
    %v1654 = vtanh.pop %v1526
    %v1655 = vtanh.pop %v1527
    %v1656 = vtanh.pop %v1528
    %v1657 = vtanh.pop %v1529
    %v1658 = vtanh.pop %v1530
    %v1659 = vtanh.pop %v1531
    %v1660 = vtanh.pop %v1532
    %v1661 = vtanh.pop %v1533
    %v1662 = vtanh.pop %v1534
    %v1663 = vtanh.pop %v1535
    %v1664 = vtanh.pop %v1536
    %v1665 = vtanh.pop %v1537
    %v1666 = vtanh.pop %v1538
    %v1667 = vtanh.pop %v1539
    %v1668 = vtanh.pop %v1540
    %v1669 = vtanh.pop %v1541
    %v1670 = vtanh.pop %v1542
    %v1671 = vtanh.pop %v1543
    %v1672 = vtanh.pop %v1544
    %v1673 = vtanh.pop %v1545
    %v1674 = vtanh.pop %v1546
    %v1675 = vtanh.pop %v1547
    %v1676 = vtanh.pop %v1548
    %v1677 = vtanh.pop %v1549
    %v1678 = vtanh.pop %v1550
    %v1679 = vtanh.pop %v1551
    %v1680 = vtanh.pop %v1552
    %v1681 = vadd.f32 %v1553, 1.0
    %v1682 = vadd.f32 %v1554, 1.0
    %v1683 = vadd.f32 %v1555, 1.0
    %v1684 = vadd.f32 %v1556, 1.0
    %v1685 = vadd.f32 %v1557, 1.0
    %v1686 = vadd.f32 %v1558, 1.0
    %v1687 = vadd.f32 %v1559, 1.0
    %v1688 = vadd.f32 %v1560, 1.0
    %v1689 = vadd.f32 %v1561, 1.0
    %v1690 = vadd.f32 %v1562, 1.0
    %v1691 = vadd.f32 %v1563, 1.0
    %v1692 = vadd.f32 %v1564, 1.0
    %v1693 = vadd.f32 %v1565, 1.0
    %v1694 = vadd.f32 %v1566, 1.0
    %v1695 = vadd.f32 %v1567, 1.0
    %v1696 = vadd.f32 %v1568, 1.0
    %v1697 = vadd.f32 %v1569, 1.0
    %v1698 = vadd.f32 %v1570, 1.0
    %v1699 = vadd.f32 %v1571, 1.0
    %v1700 = vadd.f32 %v1572, 1.0
    %v1701 = vadd.f32 %v1573, 1.0
    %v1702 = vadd.f32 %v1574, 1.0
    %v1703 = vadd.f32 %v1575, 1.0
    %v1704 = vadd.f32 %v1576, 1.0
    %v1705 = vadd.f32 %v1577, 1.0
    %v1706 = vadd.f32 %v1578, 1.0
    %v1707 = vadd.f32 %v1579, 1.0
    %v1708 = vadd.f32 %v1580, 1.0
    %v1709 = vadd.f32 %v1581, 1.0
    %v1710 = vadd.f32 %v1582, 1.0
    %v1711 = vadd.f32 %v1583, 1.0
    %v1712 = vadd.f32 %v1584, 1.0
    %v1713 = vadd.f32 %v1585, 1.0
    %v1714 = vadd.f32 %v1586, 1.0
    %v1715 = vadd.f32 %v1587, 1.0
    %v1716 = vadd.f32 %v1588, 1.0
    %v1717 = vadd.f32 %v1589, 1.0
    %v1718 = vadd.f32 %v1590, 1.0
    %v1719 = vadd.f32 %v1591, 1.0
    %v1720 = vadd.f32 %v1592, 1.0
    %v1721 = vadd.f32 %v1593, 1.0
    %v1722 = vadd.f32 %v1594, 1.0
    %v1723 = vadd.f32 %v1595, 1.0
    %v1724 = vadd.f32 %v1596, 1.0
    %v1725 = vadd.f32 %v1597, 1.0
    %v1726 = vadd.f32 %v1598, 1.0
    %v1727 = vadd.f32 %v1599, 1.0
    %v1728 = vadd.f32 %v1600, 1.0
    %v1729 = vadd.f32 %v1601, 1.0
    %v1730 = vadd.f32 %v1602, 1.0
    %v1731 = vadd.f32 %v1603, 1.0
    %v1732 = vadd.f32 %v1604, 1.0
    %v1733 = vadd.f32 %v1605, 1.0
    %v1734 = vadd.f32 %v1606, 1.0
    %v1735 = vadd.f32 %v1607, 1.0
    %v1736 = vadd.f32 %v1608, 1.0
    %v1737 = vadd.f32 %v1609, 1.0
    %v1738 = vadd.f32 %v1610, 1.0
    %v1739 = vadd.f32 %v1611, 1.0
    %v1740 = vadd.f32 %v1612, 1.0
    %v1741 = vadd.f32 %v1613, 1.0
    %v1742 = vadd.f32 %v1614, 1.0
    %v1743 = vadd.f32 %v1615, 1.0
    %v1744 = vadd.f32 %v1616, 1.0
    %v1745 = vadd.f32 %v1617, 1.0
    %v1746 = vadd.f32 %v1618, 1.0
    %v1747 = vadd.f32 %v1619, 1.0
    %v1748 = vadd.f32 %v1620, 1.0
    %v1749 = vadd.f32 %v1621, 1.0
    %v1750 = vadd.f32 %v1622, 1.0
    %v1751 = vadd.f32 %v1623, 1.0
    %v1752 = vadd.f32 %v1624, 1.0
    %v1753 = vadd.f32 %v1625, 1.0
    %v1754 = vadd.f32 %v1626, 1.0
    %v1755 = vadd.f32 %v1627, 1.0
    %v1756 = vadd.f32 %v1628, 1.0
    %v1757 = vadd.f32 %v1629, 1.0
    %v1758 = vadd.f32 %v1630, 1.0
    %v1759 = vadd.f32 %v1631, 1.0
    %v1760 = vadd.f32 %v1632, 1.0
    %v1761 = vadd.f32 %v1633, 1.0
    %v1762 = vadd.f32 %v1634, 1.0
    %v1763 = vadd.f32 %v1635, 1.0
    %v1764 = vadd.f32 %v1636, 1.0
    %v1765 = vadd.f32 %v1637, 1.0
    %v1766 = vadd.f32 %v1638, 1.0
    %v1767 = vadd.f32 %v1639, 1.0
    %v1768 = vadd.f32 %v1640, 1.0
    %v1769 = vadd.f32 %v1641, 1.0
    %v1770 = vadd.f32 %v1642, 1.0
    %v1771 = vadd.f32 %v1643, 1.0
    %v1772 = vadd.f32 %v1644, 1.0
    %v1773 = vadd.f32 %v1645, 1.0
    %v1774 = vadd.f32 %v1646, 1.0
    %v1775 = vadd.f32 %v1647, 1.0
    %v1776 = vadd.f32 %v1648, 1.0
    %v1777 = vadd.f32 %v1649, 1.0
    %v1778 = vadd.f32 %v1650, 1.0
    %v1779 = vadd.f32 %v1651, 1.0
    %v1780 = vadd.f32 %v1652, 1.0
    %v1781 = vadd.f32 %v1653, 1.0
    %v1782 = vadd.f32 %v1654, 1.0
    %v1783 = vadd.f32 %v1655, 1.0
    %v1784 = vadd.f32 %v1656, 1.0
    %v1785 = vadd.f32 %v1657, 1.0
    %v1786 = vadd.f32 %v1658, 1.0
    %v1787 = vadd.f32 %v1659, 1.0
    %v1788 = vadd.f32 %v1660, 1.0
    %v1789 = vadd.f32 %v1661, 1.0
    %v1790 = vadd.f32 %v1662, 1.0
    %v1791 = vadd.f32 %v1663, 1.0
    %v1792 = vadd.f32 %v1664, 1.0
    %v1793 = vadd.f32 %v1665, 1.0
    %v1794 = vadd.f32 %v1666, 1.0
    %v1795 = vadd.f32 %v1667, 1.0
    %v1796 = vadd.f32 %v1668, 1.0
    %v1797 = vadd.f32 %v1669, 1.0
    %v1798 = vadd.f32 %v1670, 1.0
    %v1799 = vadd.f32 %v1671, 1.0
    %v1800 = vadd.f32 %v1672, 1.0
    %v1801 = vadd.f32 %v1673, 1.0
    %v1802 = vadd.f32 %v1674, 1.0
    %v1803 = vadd.f32 %v1675, 1.0
    %v1804 = vadd.f32 %v1676, 1.0
    %v1805 = vadd.f32 %v1677, 1.0
    %v1806 = vadd.f32 %v1678, 1.0
    %v1807 = vadd.f32 %v1679, 1.0
    %v1808 = vadd.f32 %v1680, 1.0
    %v1809 = vmul.f32 %v785, %v1681
    %v1810 = vmul.f32 %v786, %v1682
    %v1811 = vmul.f32 %v787, %v1683
    %v1812 = vmul.f32 %v788, %v1684
    %v1813 = vmul.f32 %v789, %v1685
    %v1814 = vmul.f32 %v790, %v1686
    %v1815 = vmul.f32 %v791, %v1687
    %v1816 = vmul.f32 %v792, %v1688
    %v1817 = vmul.f32 %v793, %v1689
    %v1818 = vmul.f32 %v794, %v1690
    %v1819 = vmul.f32 %v795, %v1691
    %v1820 = vmul.f32 %v796, %v1692
    %v1821 = vmul.f32 %v797, %v1693
    %v1822 = vmul.f32 %v798, %v1694
    %v1823 = vmul.f32 %v799, %v1695
    %v1824 = vmul.f32 %v800, %v1696
    %v1825 = vmul.f32 %v801, %v1697
    %v1826 = vmul.f32 %v802, %v1698
    %v1827 = vmul.f32 %v803, %v1699
    %v1828 = vmul.f32 %v804, %v1700
    %v1829 = vmul.f32 %v805, %v1701
    %v1830 = vmul.f32 %v806, %v1702
    %v1831 = vmul.f32 %v807, %v1703
    %v1832 = vmul.f32 %v808, %v1704
    %v1833 = vmul.f32 %v809, %v1705
    %v1834 = vmul.f32 %v810, %v1706
    %v1835 = vmul.f32 %v811, %v1707
    %v1836 = vmul.f32 %v812, %v1708
    %v1837 = vmul.f32 %v813, %v1709
    %v1838 = vmul.f32 %v814, %v1710
    %v1839 = vmul.f32 %v815, %v1711
    %v1840 = vmul.f32 %v816, %v1712
    %v1841 = vmul.f32 %v817, %v1713
    %v1842 = vmul.f32 %v818, %v1714
    %v1843 = vmul.f32 %v819, %v1715
    %v1844 = vmul.f32 %v820, %v1716
    %v1845 = vmul.f32 %v821, %v1717
    %v1846 = vmul.f32 %v822, %v1718
    %v1847 = vmul.f32 %v823, %v1719
    %v1848 = vmul.f32 %v824, %v1720
    %v1849 = vmul.f32 %v825, %v1721
    %v1850 = vmul.f32 %v826, %v1722
    %v1851 = vmul.f32 %v827, %v1723
    %v1852 = vmul.f32 %v828, %v1724
    %v1853 = vmul.f32 %v829, %v1725
    %v1854 = vmul.f32 %v830, %v1726
    %v1855 = vmul.f32 %v831, %v1727
    %v1856 = vmul.f32 %v832, %v1728
    %v1857 = vmul.f32 %v833, %v1729
    %v1858 = vmul.f32 %v834, %v1730
    %v1859 = vmul.f32 %v835, %v1731
    %v1860 = vmul.f32 %v836, %v1732
    %v1861 = vmul.f32 %v837, %v1733
    %v1862 = vmul.f32 %v838, %v1734
    %v1863 = vmul.f32 %v839, %v1735
    %v1864 = vmul.f32 %v840, %v1736
    %v1865 = vmul.f32 %v841, %v1737
    %v1866 = vmul.f32 %v842, %v1738
    %v1867 = vmul.f32 %v843, %v1739
    %v1868 = vmul.f32 %v844, %v1740
    %v1869 = vmul.f32 %v845, %v1741
    %v1870 = vmul.f32 %v846, %v1742
    %v1871 = vmul.f32 %v847, %v1743
    %v1872 = vmul.f32 %v848, %v1744
    %v1873 = vmul.f32 %v849, %v1745
    %v1874 = vmul.f32 %v850, %v1746
    %v1875 = vmul.f32 %v851, %v1747
    %v1876 = vmul.f32 %v852, %v1748
    %v1877 = vmul.f32 %v853, %v1749
    %v1878 = vmul.f32 %v854, %v1750
    %v1879 = vmul.f32 %v855, %v1751
    %v1880 = vmul.f32 %v856, %v1752
    %v1881 = vmul.f32 %v857, %v1753
    %v1882 = vmul.f32 %v858, %v1754
    %v1883 = vmul.f32 %v859, %v1755
    %v1884 = vmul.f32 %v860, %v1756
    %v1885 = vmul.f32 %v861, %v1757
    %v1886 = vmul.f32 %v862, %v1758
    %v1887 = vmul.f32 %v863, %v1759
    %v1888 = vmul.f32 %v864, %v1760
    %v1889 = vmul.f32 %v865, %v1761
    %v1890 = vmul.f32 %v866, %v1762
    %v1891 = vmul.f32 %v867, %v1763
    %v1892 = vmul.f32 %v868, %v1764
    %v1893 = vmul.f32 %v869, %v1765
    %v1894 = vmul.f32 %v870, %v1766
    %v1895 = vmul.f32 %v871, %v1767
    %v1896 = vmul.f32 %v872, %v1768
    %v1897 = vmul.f32 %v873, %v1769
    %v1898 = vmul.f32 %v874, %v1770
    %v1899 = vmul.f32 %v875, %v1771
    %v1900 = vmul.f32 %v876, %v1772
    %v1901 = vmul.f32 %v877, %v1773
    %v1902 = vmul.f32 %v878, %v1774
    %v1903 = vmul.f32 %v879, %v1775
    %v1904 = vmul.f32 %v880, %v1776
    %v1905 = vmul.f32 %v881, %v1777
    %v1906 = vmul.f32 %v882, %v1778
    %v1907 = vmul.f32 %v883, %v1779
    %v1908 = vmul.f32 %v884, %v1780
    %v1909 = vmul.f32 %v885, %v1781
    %v1910 = vmul.f32 %v886, %v1782
    %v1911 = vmul.f32 %v887, %v1783
    %v1912 = vmul.f32 %v888, %v1784
    %v1913 = vmul.f32 %v889, %v1785
    %v1914 = vmul.f32 %v890, %v1786
    %v1915 = vmul.f32 %v891, %v1787
    %v1916 = vmul.f32 %v892, %v1788
    %v1917 = vmul.f32 %v893, %v1789
    %v1918 = vmul.f32 %v894, %v1790
    %v1919 = vmul.f32 %v895, %v1791
    %v1920 = vmul.f32 %v896, %v1792
    %v1921 = vmul.f32 %v897, %v1793
    %v1922 = vmul.f32 %v898, %v1794
    %v1923 = vmul.f32 %v899, %v1795
    %v1924 = vmul.f32 %v900, %v1796
    %v1925 = vmul.f32 %v901, %v1797
    %v1926 = vmul.f32 %v902, %v1798
    %v1927 = vmul.f32 %v903, %v1799
    %v1928 = vmul.f32 %v904, %v1800
    %v1929 = vmul.f32 %v905, %v1801
    %v1930 = vmul.f32 %v906, %v1802
    %v1931 = vmul.f32 %v907, %v1803
    %v1932 = vmul.f32 %v908, %v1804
    %v1933 = vmul.f32 %v909, %v1805
    %v1934 = vmul.f32 %v910, %v1806
    %v1935 = vmul.f32 %v911, %v1807
    %v1936 = vmul.f32 %v912, %v1808
    %v1937 = vpack.c.bf16 %v1817, %v1809
    %v1938 = vpack.c.bf16 %v1818, %v1810
    %v1939 = vpack.c.bf16 %v1819, %v1811
    %v1940 = vpack.c.bf16 %v1820, %v1812
    %v1941 = vpack.c.bf16 %v1821, %v1813
    %v1942 = vpack.c.bf16 %v1822, %v1814
    %v1943 = vpack.c.bf16 %v1823, %v1815
    %v1944 = vpack.c.bf16 %v1824, %v1816
    %v1945 = vpack.c.bf16 %v1833, %v1825
    %v1946 = vpack.c.bf16 %v1834, %v1826
    %v1947 = vpack.c.bf16 %v1835, %v1827
    %v1948 = vpack.c.bf16 %v1836, %v1828
    %v1949 = vpack.c.bf16 %v1837, %v1829
    %v1950 = vpack.c.bf16 %v1838, %v1830
    %v1951 = vpack.c.bf16 %v1839, %v1831
    %v1952 = vpack.c.bf16 %v1840, %v1832
    %v1953 = vpack.c.bf16 %v1849, %v1841
    %v1954 = vpack.c.bf16 %v1850, %v1842
    %v1955 = vpack.c.bf16 %v1851, %v1843
    %v1956 = vpack.c.bf16 %v1852, %v1844
    %v1957 = vpack.c.bf16 %v1853, %v1845
    %v1958 = vpack.c.bf16 %v1854, %v1846
    %v1959 = vpack.c.bf16 %v1855, %v1847
    %v1960 = vpack.c.bf16 %v1856, %v1848
    %v1961 = vpack.c.bf16 %v1865, %v1857
    %v1962 = vpack.c.bf16 %v1866, %v1858
    %v1963 = vpack.c.bf16 %v1867, %v1859
    %v1964 = vpack.c.bf16 %v1868, %v1860
    %v1965 = vpack.c.bf16 %v1869, %v1861
    %v1966 = vpack.c.bf16 %v1870, %v1862
    %v1967 = vpack.c.bf16 %v1871, %v1863
    %v1968 = vpack.c.bf16 %v1872, %v1864
    %v1969 = vpack.c.bf16 %v1881, %v1873
    %v1970 = vpack.c.bf16 %v1882, %v1874
    %v1971 = vpack.c.bf16 %v1883, %v1875
    %v1972 = vpack.c.bf16 %v1884, %v1876
    %v1973 = vpack.c.bf16 %v1885, %v1877
    %v1974 = vpack.c.bf16 %v1886, %v1878
    %v1975 = vpack.c.bf16 %v1887, %v1879
    %v1976 = vpack.c.bf16 %v1888, %v1880
    %v1977 = vpack.c.bf16 %v1897, %v1889
    %v1978 = vpack.c.bf16 %v1898, %v1890
    %v1979 = vpack.c.bf16 %v1899, %v1891
    %v1980 = vpack.c.bf16 %v1900, %v1892
    %v1981 = vpack.c.bf16 %v1901, %v1893
    %v1982 = vpack.c.bf16 %v1902, %v1894
    %v1983 = vpack.c.bf16 %v1903, %v1895
    %v1984 = vpack.c.bf16 %v1904, %v1896
    %v1985 = vpack.c.bf16 %v1913, %v1905
    %v1986 = vpack.c.bf16 %v1914, %v1906
    %v1987 = vpack.c.bf16 %v1915, %v1907
    %v1988 = vpack.c.bf16 %v1916, %v1908
    %v1989 = vpack.c.bf16 %v1917, %v1909
    %v1990 = vpack.c.bf16 %v1918, %v1910
    %v1991 = vpack.c.bf16 %v1919, %v1911
    %v1992 = vpack.c.bf16 %v1920, %v1912
    %v1993 = vpack.c.bf16 %v1929, %v1921
    %v1994 = vpack.c.bf16 %v1930, %v1922
    %v1995 = vpack.c.bf16 %v1931, %v1923
    %v1996 = vpack.c.bf16 %v1932, %v1924
    %v1997 = vpack.c.bf16 %v1933, %v1925
    %v1998 = vpack.c.bf16 %v1934, %v1926
    %v1999 = vpack.c.bf16 %v1935, %v1927
    %v2000 = vpack.c.bf16 %v1936, %v1928
    %v2001 = vld [vmem:[#allocation5] sm:$0xf]
    %v2002 = vld [vmem:[#allocation5 + $0x4] sm:$0xf]
    %v2003 = vld [vmem:[#allocation5 + $0x8] sm:$0xf]
    %v2004 = vld [vmem:[#allocation5 + $0xc] sm:$0xf]
    %v2005 = vld [vmem:[#allocation5 + $0x10] sm:$0xf]
    %v2006 = vld [vmem:[#allocation5 + $0x14] sm:$0xf]
    %v2007 = vld [vmem:[#allocation5 + $0x18] sm:$0xf]
    %v2008 = vld [vmem:[#allocation5 + $0x1c] sm:$0xf]
    %v2009 = vld [vmem:[#allocation5 + $0x20] sm:$0xf]
    %v2010 = vld [vmem:[#allocation5 + $0x24] sm:$0xf]
    %v2011 = vld [vmem:[#allocation5 + $0x28] sm:$0xf]
    %v2012 = vld [vmem:[#allocation5 + $0x2c] sm:$0xf]
    %v2013 = vld [vmem:[#allocation5 + $0x30] sm:$0xf]
    %v2014 = vld [vmem:[#allocation5 + $0x34] sm:$0xf]
    %v2015 = vld [vmem:[#allocation5 + $0x38] sm:$0xf]
    %v2016 = vld [vmem:[#allocation5 + $0x3c] sm:$0xf]
    %v2017 = vld [vmem:[#allocation5 + $0x40] sm:$0xf]
    %v2018 = vld [vmem:[#allocation5 + $0x44] sm:$0xf]
    %v2019 = vld [vmem:[#allocation5 + $0x48] sm:$0xf]
    %v2020 = vld [vmem:[#allocation5 + $0x4c] sm:$0xf]
    %v2021 = vld [vmem:[#allocation5 + $0x50] sm:$0xf]
    %v2022 = vld [vmem:[#allocation5 + $0x54] sm:$0xf]
    %v2023 = vld [vmem:[#allocation5 + $0x58] sm:$0xf]
    %v2024 = vld [vmem:[#allocation5 + $0x5c] sm:$0xf]
    %v2025 = vld [vmem:[#allocation5 + $0x60] sm:$0xf]
    %v2026 = vld [vmem:[#allocation5 + $0x64] sm:$0xf]
    %v2027 = vld [vmem:[#allocation5 + $0x68] sm:$0xf]
    %v2028 = vld [vmem:[#allocation5 + $0x6c] sm:$0xf]
    %v2029 = vld [vmem:[#allocation5 + $0x70] sm:$0xf]
    %v2030 = vld [vmem:[#allocation5 + $0x74] sm:$0xf]
    %v2031 = vld [vmem:[#allocation5 + $0x78] sm:$0xf]
    %v2032 = vld [vmem:[#allocation5 + $0x7c] sm:$0xf]
    %v2033 = vld [vmem:[#allocation5 + $0x80] sm:$0xf]
    %v2034 = vld [vmem:[#allocation5 + $0x84] sm:$0xf]
    %v2035 = vld [vmem:[#allocation5 + $0x88] sm:$0xf]
    %v2036 = vld [vmem:[#allocation5 + $0x8c] sm:$0xf]
    %v2037 = vld [vmem:[#allocation5 + $0x90] sm:$0xf]
    %v2038 = vld [vmem:[#allocation5 + $0x94] sm:$0xf]
    %v2039 = vld [vmem:[#allocation5 + $0x98] sm:$0xf]
    %v2040 = vld [vmem:[#allocation5 + $0x9c] sm:$0xf]
    %v2041 = vld [vmem:[#allocation5 + $0xa0] sm:$0xf]
    %v2042 = vld [vmem:[#allocation5 + $0xa4] sm:$0xf]
    %v2043 = vld [vmem:[#allocation5 + $0xa8] sm:$0xf]
    %v2044 = vld [vmem:[#allocation5 + $0xac] sm:$0xf]
    %v2045 = vld [vmem:[#allocation5 + $0xb0] sm:$0xf]
    %v2046 = vld [vmem:[#allocation5 + $0xb4] sm:$0xf]
    %v2047 = vld [vmem:[#allocation5 + $0xb8] sm:$0xf]
    %v2048 = vld [vmem:[#allocation5 + $0xbc] sm:$0xf]
    %v2049 = vld [vmem:[#allocation5 + $0xc0] sm:$0xf]
    %v2050 = vld [vmem:[#allocation5 + $0xc4] sm:$0xf]
    %v2051 = vld [vmem:[#allocation5 + $0xc8] sm:$0xf]
    %v2052 = vld [vmem:[#allocation5 + $0xcc] sm:$0xf]
    %v2053 = vld [vmem:[#allocation5 + $0xd0] sm:$0xf]
    %v2054 = vld [vmem:[#allocation5 + $0xd4] sm:$0xf]
    %v2055 = vld [vmem:[#allocation5 + $0xd8] sm:$0xf]
    %v2056 = vld [vmem:[#allocation5 + $0xdc] sm:$0xf]
    %v2057 = vld [vmem:[#allocation5 + $0xe0] sm:$0xf]
    %v2058 = vld [vmem:[#allocation5 + $0xe4] sm:$0xf]
    %v2059 = vld [vmem:[#allocation5 + $0xe8] sm:$0xf]
    %v2060 = vld [vmem:[#allocation5 + $0xec] sm:$0xf]
    %v2061 = vld [vmem:[#allocation5 + $0xf0] sm:$0xf]
    %v2062 = vld [vmem:[#allocation5 + $0xf4] sm:$0xf]
    %v2063 = vld [vmem:[#allocation5 + $0xf8] sm:$0xf]
    %v2064 = vld [vmem:[#allocation5 + $0xfc] sm:$0xf]
    %v2065 = vld [vmem:[#allocation5 + $0x100] sm:$0xf]
    %v2066 = vld [vmem:[#allocation5 + $0x104] sm:$0xf]
    %v2067 = vld [vmem:[#allocation5 + $0x108] sm:$0xf]
    %v2068 = vld [vmem:[#allocation5 + $0x10c] sm:$0xf]
    %v2069 = vld [vmem:[#allocation5 + $0x110] sm:$0xf]
    %v2070 = vld [vmem:[#allocation5 + $0x114] sm:$0xf]
    %v2071 = vld [vmem:[#allocation5 + $0x118] sm:$0xf]
    %v2072 = vld [vmem:[#allocation5 + $0x11c] sm:$0xf]
    %v2073 = vld [vmem:[#allocation5 + $0x120] sm:$0xf]
    %v2074 = vld [vmem:[#allocation5 + $0x124] sm:$0xf]
    %v2075 = vld [vmem:[#allocation5 + $0x128] sm:$0xf]
    %v2076 = vld [vmem:[#allocation5 + $0x12c] sm:$0xf]
    %v2077 = vld [vmem:[#allocation5 + $0x130] sm:$0xf]
    %v2078 = vld [vmem:[#allocation5 + $0x134] sm:$0xf]
    %v2079 = vld [vmem:[#allocation5 + $0x138] sm:$0xf]
    %v2080 = vld [vmem:[#allocation5 + $0x13c] sm:$0xf]
    %v2081 = vld [vmem:[#allocation5 + $0x140] sm:$0xf]
    %v2082 = vld [vmem:[#allocation5 + $0x144] sm:$0xf]
    %v2083 = vld [vmem:[#allocation5 + $0x148] sm:$0xf]
    %v2084 = vld [vmem:[#allocation5 + $0x14c] sm:$0xf]
    %v2085 = vld [vmem:[#allocation5 + $0x150] sm:$0xf]
    %v2086 = vld [vmem:[#allocation5 + $0x154] sm:$0xf]
    %v2087 = vld [vmem:[#allocation5 + $0x158] sm:$0xf]
    %v2088 = vld [vmem:[#allocation5 + $0x15c] sm:$0xf]
    %v2089 = vld [vmem:[#allocation5 + $0x160] sm:$0xf]
    %v2090 = vld [vmem:[#allocation5 + $0x164] sm:$0xf]
    %v2091 = vld [vmem:[#allocation5 + $0x168] sm:$0xf]
    %v2092 = vld [vmem:[#allocation5 + $0x16c] sm:$0xf]
    %v2093 = vld [vmem:[#allocation5 + $0x170] sm:$0xf]
    %v2094 = vld [vmem:[#allocation5 + $0x174] sm:$0xf]
    %v2095 = vld [vmem:[#allocation5 + $0x178] sm:$0xf]
    %v2096 = vld [vmem:[#allocation5 + $0x17c] sm:$0xf]
    %v2097 = vld [vmem:[#allocation5 + $0x180] sm:$0xf]
    %v2098 = vld [vmem:[#allocation5 + $0x184] sm:$0xf]
    %v2099 = vld [vmem:[#allocation5 + $0x188] sm:$0xf]
    %v2100 = vld [vmem:[#allocation5 + $0x18c] sm:$0xf]
    %v2101 = vld [vmem:[#allocation5 + $0x190] sm:$0xf]
    %v2102 = vld [vmem:[#allocation5 + $0x194] sm:$0xf]
    %v2103 = vld [vmem:[#allocation5 + $0x198] sm:$0xf]
    %v2104 = vld [vmem:[#allocation5 + $0x19c] sm:$0xf]
    %v2105 = vld [vmem:[#allocation5 + $0x1a0] sm:$0xf]
    %v2106 = vld [vmem:[#allocation5 + $0x1a4] sm:$0xf]
    %v2107 = vld [vmem:[#allocation5 + $0x1a8] sm:$0xf]
    %v2108 = vld [vmem:[#allocation5 + $0x1ac] sm:$0xf]
    %v2109 = vld [vmem:[#allocation5 + $0x1b0] sm:$0xf]
    %v2110 = vld [vmem:[#allocation5 + $0x1b4] sm:$0xf]
    %v2111 = vld [vmem:[#allocation5 + $0x1b8] sm:$0xf]
    %v2112 = vld [vmem:[#allocation5 + $0x1bc] sm:$0xf]
    %v2113 = vld [vmem:[#allocation5 + $0x1c0] sm:$0xf]
    %v2114 = vld [vmem:[#allocation5 + $0x1c4] sm:$0xf]
    %v2115 = vld [vmem:[#allocation5 + $0x1c8] sm:$0xf]
    %v2116 = vld [vmem:[#allocation5 + $0x1cc] sm:$0xf]
    %v2117 = vld [vmem:[#allocation5 + $0x1d0] sm:$0xf]
    %v2118 = vld [vmem:[#allocation5 + $0x1d4] sm:$0xf]
    %v2119 = vld [vmem:[#allocation5 + $0x1d8] sm:$0xf]
    %v2120 = vld [vmem:[#allocation5 + $0x1dc] sm:$0xf]
    %v2121 = vld [vmem:[#allocation5 + $0x1e0] sm:$0xf]
    %v2122 = vld [vmem:[#allocation5 + $0x1e4] sm:$0xf]
    %v2123 = vld [vmem:[#allocation5 + $0x1e8] sm:$0xf]
    %v2124 = vld [vmem:[#allocation5 + $0x1ec] sm:$0xf]
    %v2125 = vld [vmem:[#allocation5 + $0x1f0] sm:$0xf]
    %v2126 = vld [vmem:[#allocation5 + $0x1f4] sm:$0xf]
    %v2127 = vld [vmem:[#allocation5 + $0x1f8] sm:$0xf]
    %v2128 = vld [vmem:[#allocation5 + $0x1fc] sm:$0xf]
    %v2129 = vld [vmem:[%s4] sm:$0x1]
    %v2131 = vlaneseq
    %v2132 = vshrl.u32 %v2131, 7
    %v2133 = vsub.s32 0, %v2132
    %v2134 = vrot.slane %v2129, %v2133
    %v2264 = vunpack.c.l.b16 %v2001
    %v2265 = vunpack.c.l.b16 %v2002
    %v2266 = vunpack.c.l.b16 %v2003
    %v2267 = vunpack.c.l.b16 %v2004
    %v2268 = vunpack.c.l.b16 %v2005
    %v2269 = vunpack.c.l.b16 %v2006
    %v2270 = vunpack.c.l.b16 %v2007
    %v2271 = vunpack.c.l.b16 %v2008
    %v2272 = vunpack.c.l.b16 %v2009
    %v2273 = vunpack.c.l.b16 %v2010
    %v2274 = vunpack.c.l.b16 %v2011
    %v2275 = vunpack.c.l.b16 %v2012
    %v2276 = vunpack.c.l.b16 %v2013
    %v2277 = vunpack.c.l.b16 %v2014
    %v2278 = vunpack.c.l.b16 %v2015
    %v2279 = vunpack.c.l.b16 %v2016
    %v2280 = vunpack.c.l.b16 %v2017
    %v2281 = vunpack.c.l.b16 %v2018
    %v2282 = vunpack.c.l.b16 %v2019
    %v2283 = vunpack.c.l.b16 %v2020
    %v2284 = vunpack.c.l.b16 %v2021
    %v2285 = vunpack.c.l.b16 %v2022
    %v2286 = vunpack.c.l.b16 %v2023
    %v2287 = vunpack.c.l.b16 %v2024
    %v2288 = vunpack.c.l.b16 %v2025
    %v2289 = vunpack.c.l.b16 %v2026
    %v2290 = vunpack.c.l.b16 %v2027
    %v2291 = vunpack.c.l.b16 %v2028
    %v2292 = vunpack.c.l.b16 %v2029
    %v2293 = vunpack.c.l.b16 %v2030
    %v2294 = vunpack.c.l.b16 %v2031
    %v2295 = vunpack.c.l.b16 %v2032
    %v2296 = vunpack.c.l.b16 %v2033
    %v2297 = vunpack.c.l.b16 %v2034
    %v2298 = vunpack.c.l.b16 %v2035
    %v2299 = vunpack.c.l.b16 %v2036
    %v2300 = vunpack.c.l.b16 %v2037
    %v2301 = vunpack.c.l.b16 %v2038
    %v2302 = vunpack.c.l.b16 %v2039
    %v2303 = vunpack.c.l.b16 %v2040
    %v2304 = vunpack.c.l.b16 %v2041
    %v2305 = vunpack.c.l.b16 %v2042
    %v2306 = vunpack.c.l.b16 %v2043
    %v2307 = vunpack.c.l.b16 %v2044
    %v2308 = vunpack.c.l.b16 %v2045
    %v2309 = vunpack.c.l.b16 %v2046
    %v2310 = vunpack.c.l.b16 %v2047
    %v2311 = vunpack.c.l.b16 %v2048
    %v2312 = vunpack.c.l.b16 %v2049
    %v2313 = vunpack.c.l.b16 %v2050
    %v2314 = vunpack.c.l.b16 %v2051
    %v2315 = vunpack.c.l.b16 %v2052
    %v2316 = vunpack.c.l.b16 %v2053
    %v2317 = vunpack.c.l.b16 %v2054
    %v2318 = vunpack.c.l.b16 %v2055
    %v2319 = vunpack.c.l.b16 %v2056
    %v2320 = vunpack.c.l.b16 %v2057
    %v2321 = vunpack.c.l.b16 %v2058
    %v2322 = vunpack.c.l.b16 %v2059
    %v2323 = vunpack.c.l.b16 %v2060
    %v2324 = vunpack.c.l.b16 %v2061
    %v2325 = vunpack.c.l.b16 %v2062
    %v2326 = vunpack.c.l.b16 %v2063
    %v2327 = vunpack.c.l.b16 %v2064
    %v2328 = vunpack.c.l.b16 %v2065
    %v2329 = vunpack.c.l.b16 %v2066
    %v2330 = vunpack.c.l.b16 %v2067
    %v2331 = vunpack.c.l.b16 %v2068
    %v2332 = vunpack.c.l.b16 %v2069
    %v2333 = vunpack.c.l.b16 %v2070
    %v2334 = vunpack.c.l.b16 %v2071
    %v2335 = vunpack.c.l.b16 %v2072
    %v2336 = vunpack.c.l.b16 %v2073
    %v2337 = vunpack.c.l.b16 %v2074
    %v2338 = vunpack.c.l.b16 %v2075
    %v2339 = vunpack.c.l.b16 %v2076
    %v2340 = vunpack.c.l.b16 %v2077
    %v2341 = vunpack.c.l.b16 %v2078
    %v2342 = vunpack.c.l.b16 %v2079
    %v2343 = vunpack.c.l.b16 %v2080
    %v2344 = vunpack.c.l.b16 %v2081
    %v2345 = vunpack.c.l.b16 %v2082
    %v2346 = vunpack.c.l.b16 %v2083
    %v2347 = vunpack.c.l.b16 %v2084
    %v2348 = vunpack.c.l.b16 %v2085
    %v2349 = vunpack.c.l.b16 %v2086
    %v2350 = vunpack.c.l.b16 %v2087
    %v2351 = vunpack.c.l.b16 %v2088
    %v2352 = vunpack.c.l.b16 %v2089
    %v2353 = vunpack.c.l.b16 %v2090
    %v2354 = vunpack.c.l.b16 %v2091
    %v2355 = vunpack.c.l.b16 %v2092
    %v2356 = vunpack.c.l.b16 %v2093
    %v2357 = vunpack.c.l.b16 %v2094
    %v2358 = vunpack.c.l.b16 %v2095
    %v2359 = vunpack.c.l.b16 %v2096
    %v2360 = vunpack.c.l.b16 %v2097
    %v2361 = vunpack.c.l.b16 %v2098
    %v2362 = vunpack.c.l.b16 %v2099
    %v2363 = vunpack.c.l.b16 %v2100
    %v2364 = vunpack.c.l.b16 %v2101
    %v2365 = vunpack.c.l.b16 %v2102
    %v2366 = vunpack.c.l.b16 %v2103
    %v2367 = vunpack.c.l.b16 %v2104
    %v2368 = vunpack.c.l.b16 %v2105
    %v2369 = vunpack.c.l.b16 %v2106
    %v2370 = vunpack.c.l.b16 %v2107
    %v2371 = vunpack.c.l.b16 %v2108
    %v2372 = vunpack.c.l.b16 %v2109
    %v2373 = vunpack.c.l.b16 %v2110
    %v2374 = vunpack.c.l.b16 %v2111
    %v2375 = vunpack.c.l.b16 %v2112
    %v2376 = vunpack.c.l.b16 %v2113
    %v2377 = vunpack.c.l.b16 %v2114
    %v2378 = vunpack.c.l.b16 %v2115
    %v2379 = vunpack.c.l.b16 %v2116
    %v2380 = vunpack.c.l.b16 %v2117
    %v2381 = vunpack.c.l.b16 %v2118
    %v2382 = vunpack.c.l.b16 %v2119
    %v2383 = vunpack.c.l.b16 %v2120
    %v2384 = vunpack.c.l.b16 %v2121
    %v2385 = vunpack.c.l.b16 %v2122
    %v2386 = vunpack.c.l.b16 %v2123
    %v2387 = vunpack.c.l.b16 %v2124
    %v2388 = vunpack.c.l.b16 %v2125
    %v2389 = vunpack.c.l.b16 %v2126
    %v2390 = vunpack.c.l.b16 %v2127
    %v2391 = vunpack.c.l.b16 %v2128
    %v2392 = vpack.c.b16 %v2265, %v2264
    %v2393 = vpack.c.b16 %v2267, %v2266
    %v2394 = vpack.c.b16 %v2269, %v2268
    %v2395 = vpack.c.b16 %v2271, %v2270
    %v2396 = vpack.c.b16 %v2273, %v2272
    %v2397 = vpack.c.b16 %v2275, %v2274
    %v2398 = vpack.c.b16 %v2277, %v2276
    %v2399 = vpack.c.b16 %v2279, %v2278
    %v2400 = vpack.c.b16 %v2281, %v2280
    %v2401 = vpack.c.b16 %v2283, %v2282
    %v2402 = vpack.c.b16 %v2285, %v2284
    %v2403 = vpack.c.b16 %v2287, %v2286
    %v2404 = vpack.c.b16 %v2289, %v2288
    %v2405 = vpack.c.b16 %v2291, %v2290
    %v2406 = vpack.c.b16 %v2293, %v2292
    %v2407 = vpack.c.b16 %v2295, %v2294
    %v2408 = vpack.c.b16 %v2297, %v2296
    %v2409 = vpack.c.b16 %v2299, %v2298
    %v2410 = vpack.c.b16 %v2301, %v2300
    %v2411 = vpack.c.b16 %v2303, %v2302
    %v2412 = vpack.c.b16 %v2305, %v2304
    %v2413 = vpack.c.b16 %v2307, %v2306
    %v2414 = vpack.c.b16 %v2309, %v2308
    %v2415 = vpack.c.b16 %v2311, %v2310
    %v2416 = vpack.c.b16 %v2313, %v2312
    %v2417 = vpack.c.b16 %v2315, %v2314
    %v2418 = vpack.c.b16 %v2317, %v2316
    %v2419 = vpack.c.b16 %v2319, %v2318
    %v2420 = vpack.c.b16 %v2321, %v2320
    %v2421 = vpack.c.b16 %v2323, %v2322
    %v2422 = vpack.c.b16 %v2325, %v2324
    %v2423 = vpack.c.b16 %v2327, %v2326
    %v2424 = vpack.c.b16 %v2329, %v2328
    %v2425 = vpack.c.b16 %v2331, %v2330
    %v2426 = vpack.c.b16 %v2333, %v2332
    %v2427 = vpack.c.b16 %v2335, %v2334
    %v2428 = vpack.c.b16 %v2337, %v2336
    %v2429 = vpack.c.b16 %v2339, %v2338
    %v2430 = vpack.c.b16 %v2341, %v2340
    %v2431 = vpack.c.b16 %v2343, %v2342
    %v2432 = vpack.c.b16 %v2345, %v2344
    %v2433 = vpack.c.b16 %v2347, %v2346
    %v2434 = vpack.c.b16 %v2349, %v2348
    %v2435 = vpack.c.b16 %v2351, %v2350
    %v2436 = vpack.c.b16 %v2353, %v2352
    %v2437 = vpack.c.b16 %v2355, %v2354
    %v2438 = vpack.c.b16 %v2357, %v2356
    %v2439 = vpack.c.b16 %v2359, %v2358
    %v2440 = vpack.c.b16 %v2361, %v2360
    %v2441 = vpack.c.b16 %v2363, %v2362
    %v2442 = vpack.c.b16 %v2365, %v2364
    %v2443 = vpack.c.b16 %v2367, %v2366
    %v2444 = vpack.c.b16 %v2369, %v2368
    %v2445 = vpack.c.b16 %v2371, %v2370
    %v2446 = vpack.c.b16 %v2373, %v2372
    %v2447 = vpack.c.b16 %v2375, %v2374
    %v2448 = vpack.c.b16 %v2377, %v2376
    %v2449 = vpack.c.b16 %v2379, %v2378
    %v2450 = vpack.c.b16 %v2381, %v2380
    %v2451 = vpack.c.b16 %v2383, %v2382
    %v2452 = vpack.c.b16 %v2385, %v2384
    %v2453 = vpack.c.b16 %v2387, %v2386
    %v2454 = vpack.c.b16 %v2389, %v2388
    %v2455 = vpack.c.b16 %v2391, %v2390
    %2520 = vmatprep.subr.bf16.mxu0 0
    %2521 = vmatpush1.bf16.msra.mxu0 %v2399
    %2522 = vmatprep.subr.bf16.mxu0 0
    %2523 = vmatpush1.bf16.msra.mxu0 %v2398
    %2524 = vmatprep.subr.bf16.mxu0 0
    %2525 = vmatpush1.bf16.msra.mxu0 %v2397
    %2526 = vmatprep.subr.bf16.mxu0 0
    %2527 = vmatpush1.bf16.msra.mxu0 %v2396
    %2528 = vmatprep.subr.bf16.mxu0 0
    %2529 = vmatpush1.bf16.msra.mxu0 %v2395
    %2530 = vmatprep.subr.bf16.mxu0 0
    %2531 = vmatpush1.bf16.msra.mxu0 %v2394
    %2532 = vmatprep.subr.bf16.mxu0 0
    %2533 = vmatpush1.bf16.msra.mxu0 %v2393
    %2534 = vmatprep.subr.bf16.mxu0 0
    %2535 = vmatpush1.bf16.msra.mxu0 %v2392
    %2536 = vmatprep.subr.bf16.mxu0 0
    %2537 = vmatpush2.bf16.msra.mxu0 %v2407
    %2538 = vmatprep.subr.bf16.mxu0 0
    %2539 = vmatpush2.bf16.msra.mxu0 %v2406
    %2540 = vmatprep.subr.bf16.mxu0 0
    %2541 = vmatpush2.bf16.msra.mxu0 %v2405
    %2542 = vmatprep.subr.bf16.mxu0 0
    %2543 = vmatpush2.bf16.msra.mxu0 %v2404
    %2544 = vmatprep.subr.bf16.mxu0 0
    %2545 = vmatpush2.bf16.msra.mxu0 %v2403
    %2546 = vmatprep.subr.bf16.mxu0 0
    %2547 = vmatpush2.bf16.msra.mxu0 %v2402
    %2548 = vmatprep.subr.bf16.mxu0 0
    %2549 = vmatpush2.bf16.msra.mxu0 %v2401
    %2550 = vmatprep.subr.bf16.mxu0 0
    %2551 = vmatpush2.bf16.msra.mxu0 %v2400
    %2552 = vmatprep.mubr.bf16.mxu0 %v1938
    %2553 = vmatmul.mubr.bf16.gmra.mxu0 %v1937
    %v2554 = vpop.f32.mrf.mxu0
    %v2555 = vadd.f32 %v2134, %v2554
    %v2556 = vpop.f32.mrf.mxu0
    %v2557 = vpop.f32.mrf.mxu0
    %v2558 = vadd.f32 %v2134, %v2557
    %v2559 = vpop.f32.mrf.mxu0
    %2560 = vmatprep.mubr.bf16.mxu0 %v1946
    %2561 = vmatmul.mubr.bf16.gmra.mxu0 %v1945
    %v2562 = vpop.f32.mrf.mxu0
    %v2563 = vadd.f32 %v2134, %v2562
    %v2564 = vpop.f32.mrf.mxu0
    %v2565 = vpop.f32.mrf.mxu0
    %v2566 = vadd.f32 %v2134, %v2565
    %v2567 = vpop.f32.mrf.mxu0
    %2568 = vmatprep.mubr.bf16.mxu0 %v1954
    %2569 = vmatmul.mubr.bf16.gmra.mxu0 %v1953
    %v2570 = vpop.f32.mrf.mxu0
    %v2571 = vadd.f32 %v2134, %v2570
    %v2572 = vpop.f32.mrf.mxu0
    %v2573 = vpop.f32.mrf.mxu0
    %v2574 = vadd.f32 %v2134, %v2573
    %v2575 = vpop.f32.mrf.mxu0
    %2576 = vmatprep.mubr.bf16.mxu0 %v1962
    %2577 = vmatmul.mubr.bf16.gmra.mxu0 %v1961
    %v2578 = vpop.f32.mrf.mxu0
    %v2579 = vadd.f32 %v2134, %v2578
    %v2580 = vpop.f32.mrf.mxu0
    %v2581 = vpop.f32.mrf.mxu0
    %v2582 = vadd.f32 %v2134, %v2581
    %v2583 = vpop.f32.mrf.mxu0
    %2584 = vmatprep.mubr.bf16.mxu0 %v1970
    %2585 = vmatmul.mubr.bf16.gmra.mxu0 %v1969
    %v2586 = vpop.f32.mrf.mxu0
    %v2587 = vadd.f32 %v2134, %v2586
    %v2588 = vpop.f32.mrf.mxu0
    %v2589 = vpop.f32.mrf.mxu0
    %v2590 = vadd.f32 %v2134, %v2589
    %v2591 = vpop.f32.mrf.mxu0
    %2592 = vmatprep.mubr.bf16.mxu0 %v1978
    %2593 = vmatmul.mubr.bf16.gmra.mxu0 %v1977
    %v2594 = vpop.f32.mrf.mxu0
    %v2595 = vadd.f32 %v2134, %v2594
    %v2596 = vpop.f32.mrf.mxu0
    %v2597 = vpop.f32.mrf.mxu0
    %v2598 = vadd.f32 %v2134, %v2597
    %v2599 = vpop.f32.mrf.mxu0
    %2600 = vmatprep.mubr.bf16.mxu0 %v1986
    %2601 = vmatmul.mubr.bf16.gmra.mxu0 %v1985
    %v2602 = vpop.f32.mrf.mxu0
    %v2603 = vadd.f32 %v2134, %v2602
    %v2604 = vpop.f32.mrf.mxu0
    %v2605 = vpop.f32.mrf.mxu0
    %v2606 = vadd.f32 %v2134, %v2605
    %v2607 = vpop.f32.mrf.mxu0
    %2608 = vmatprep.mubr.bf16.mxu0 %v1994
    %2609 = vmatmul.mubr.bf16.gmra.mxu0 %v1993
    %v2610 = vpop.f32.mrf.mxu0
    %v2611 = vadd.f32 %v2134, %v2610
    %v2612 = vpop.f32.mrf.mxu0
    %v2613 = vpop.f32.mrf.mxu0
    %v2614 = vadd.f32 %v2134, %v2613
    %v2615 = vpop.f32.mrf.mxu0
    %2616 = vdwg.mxu0
    %2617 = vmatprep.subr.bf16.mxu0 0
    %2618 = vmatpush1.bf16.msra.mxu0 %v2415
    %2619 = vmatprep.subr.bf16.mxu0 0
    %2620 = vmatpush1.bf16.msra.mxu0 %v2414
    %2621 = vmatprep.subr.bf16.mxu0 0
    %2622 = vmatpush1.bf16.msra.mxu0 %v2413
    %2623 = vmatprep.subr.bf16.mxu0 0
    %2624 = vmatpush1.bf16.msra.mxu0 %v2412
    %2625 = vmatprep.subr.bf16.mxu0 0
    %2626 = vmatpush1.bf16.msra.mxu0 %v2411
    %2627 = vmatprep.subr.bf16.mxu0 0
    %2628 = vmatpush1.bf16.msra.mxu0 %v2410
    %2629 = vmatprep.subr.bf16.mxu0 0
    %2630 = vmatpush1.bf16.msra.mxu0 %v2409
    %2631 = vmatprep.subr.bf16.mxu0 0
    %2632 = vmatpush1.bf16.msra.mxu0 %v2408
    %2633 = vmatprep.subr.bf16.mxu0 0
    %2634 = vmatpush2.bf16.msra.mxu0 %v2423
    %2635 = vmatprep.subr.bf16.mxu0 0
    %2636 = vmatpush2.bf16.msra.mxu0 %v2422
    %2637 = vmatprep.subr.bf16.mxu0 0
    %2638 = vmatpush2.bf16.msra.mxu0 %v2421
    %2639 = vmatprep.subr.bf16.mxu0 0
    %2640 = vmatpush2.bf16.msra.mxu0 %v2420
    %2641 = vmatprep.subr.bf16.mxu0 0
    %2642 = vmatpush2.bf16.msra.mxu0 %v2419
    %2643 = vmatprep.subr.bf16.mxu0 0
    %2644 = vmatpush2.bf16.msra.mxu0 %v2418
    %2645 = vmatprep.subr.bf16.mxu0 0
    %2646 = vmatpush2.bf16.msra.mxu0 %v2417
    %2647 = vmatprep.subr.bf16.mxu0 0
    %2648 = vmatpush2.bf16.msra.mxu0 %v2416
    %2649 = vmatprep.mubr.bf16.mxu0 %v1940
    %2650 = vmatmul.mubr.bf16.gmra.mxu0 %v1939
    %v2651 = vpop.f32.mrf.mxu0
    %v2652 = vadd.f32 %v2555, %v2651
    %v2653 = vpop.f32.mrf.mxu0
    %v2654 = vpop.f32.mrf.mxu0
    %v2655 = vadd.f32 %v2558, %v2654
    %v2656 = vpop.f32.mrf.mxu0
    %2657 = vmatprep.mubr.bf16.mxu0 %v1948
    %2658 = vmatmul.mubr.bf16.gmra.mxu0 %v1947
    %v2659 = vpop.f32.mrf.mxu0
    %v2660 = vadd.f32 %v2563, %v2659
    %v2661 = vpop.f32.mrf.mxu0
    %v2662 = vpop.f32.mrf.mxu0
    %v2663 = vadd.f32 %v2566, %v2662
    %v2664 = vpop.f32.mrf.mxu0
    %2665 = vmatprep.mubr.bf16.mxu0 %v1956
    %2666 = vmatmul.mubr.bf16.gmra.mxu0 %v1955
    %v2667 = vpop.f32.mrf.mxu0
    %v2668 = vadd.f32 %v2571, %v2667
    %v2669 = vpop.f32.mrf.mxu0
    %v2670 = vpop.f32.mrf.mxu0
    %v2671 = vadd.f32 %v2574, %v2670
    %v2672 = vpop.f32.mrf.mxu0
    %2673 = vmatprep.mubr.bf16.mxu0 %v1964
    %2674 = vmatmul.mubr.bf16.gmra.mxu0 %v1963
    %v2675 = vpop.f32.mrf.mxu0
    %v2676 = vadd.f32 %v2579, %v2675
    %v2677 = vpop.f32.mrf.mxu0
    %v2678 = vpop.f32.mrf.mxu0
    %v2679 = vadd.f32 %v2582, %v2678
    %v2680 = vpop.f32.mrf.mxu0
    %2681 = vmatprep.mubr.bf16.mxu0 %v1972
    %2682 = vmatmul.mubr.bf16.gmra.mxu0 %v1971
    %v2683 = vpop.f32.mrf.mxu0
    %v2684 = vadd.f32 %v2587, %v2683
    %v2685 = vpop.f32.mrf.mxu0
    %v2686 = vpop.f32.mrf.mxu0
    %v2687 = vadd.f32 %v2590, %v2686
    %v2688 = vpop.f32.mrf.mxu0
    %2689 = vmatprep.mubr.bf16.mxu0 %v1980
    %2690 = vmatmul.mubr.bf16.gmra.mxu0 %v1979
    %v2691 = vpop.f32.mrf.mxu0
    %v2692 = vadd.f32 %v2595, %v2691
    %v2693 = vpop.f32.mrf.mxu0
    %v2694 = vpop.f32.mrf.mxu0
    %v2695 = vadd.f32 %v2598, %v2694
    %v2696 = vpop.f32.mrf.mxu0
    %2697 = vmatprep.mubr.bf16.mxu0 %v1988
    %2698 = vmatmul.mubr.bf16.gmra.mxu0 %v1987
    %v2699 = vpop.f32.mrf.mxu0
    %v2700 = vadd.f32 %v2603, %v2699
    %v2701 = vpop.f32.mrf.mxu0
    %v2702 = vpop.f32.mrf.mxu0
    %v2703 = vadd.f32 %v2606, %v2702
    %v2704 = vpop.f32.mrf.mxu0
    %2705 = vmatprep.mubr.bf16.mxu0 %v1996
    %2706 = vmatmul.mubr.bf16.gmra.mxu0 %v1995
    %v2707 = vpop.f32.mrf.mxu0
    %v2708 = vadd.f32 %v2611, %v2707
    %v2709 = vpop.f32.mrf.mxu0
    %v2710 = vpop.f32.mrf.mxu0
    %v2711 = vadd.f32 %v2614, %v2710
    %v2712 = vpop.f32.mrf.mxu0
    %2713 = vdwg.mxu0
    %2714 = vmatprep.subr.bf16.mxu0 0
    %2715 = vmatpush1.bf16.msra.mxu0 %v2431
    %2716 = vmatprep.subr.bf16.mxu0 0
    %2717 = vmatpush1.bf16.msra.mxu0 %v2430
    %2718 = vmatprep.subr.bf16.mxu0 0
    %2719 = vmatpush1.bf16.msra.mxu0 %v2429
    %2720 = vmatprep.subr.bf16.mxu0 0
    %2721 = vmatpush1.bf16.msra.mxu0 %v2428
    %2722 = vmatprep.subr.bf16.mxu0 0
    %2723 = vmatpush1.bf16.msra.mxu0 %v2427
    %2724 = vmatprep.subr.bf16.mxu0 0
    %2725 = vmatpush1.bf16.msra.mxu0 %v2426
    %2726 = vmatprep.subr.bf16.mxu0 0
    %2727 = vmatpush1.bf16.msra.mxu0 %v2425
    %2728 = vmatprep.subr.bf16.mxu0 0
    %2729 = vmatpush1.bf16.msra.mxu0 %v2424
    %2730 = vmatprep.subr.bf16.mxu0 0
    %2731 = vmatpush2.bf16.msra.mxu0 %v2439
    %2732 = vmatprep.subr.bf16.mxu0 0
    %2733 = vmatpush2.bf16.msra.mxu0 %v2438
    %2734 = vmatprep.subr.bf16.mxu0 0
    %2735 = vmatpush2.bf16.msra.mxu0 %v2437
    %2736 = vmatprep.subr.bf16.mxu0 0
    %2737 = vmatpush2.bf16.msra.mxu0 %v2436
    %2738 = vmatprep.subr.bf16.mxu0 0
    %2739 = vmatpush2.bf16.msra.mxu0 %v2435
    %2740 = vmatprep.subr.bf16.mxu0 0
    %2741 = vmatpush2.bf16.msra.mxu0 %v2434
    %2742 = vmatprep.subr.bf16.mxu0 0
    %2743 = vmatpush2.bf16.msra.mxu0 %v2433
    %2744 = vmatprep.subr.bf16.mxu0 0
    %2745 = vmatpush2.bf16.msra.mxu0 %v2432
    %2746 = vmatprep.mubr.bf16.mxu0 %v1942
    %2747 = vmatmul.mubr.bf16.gmra.mxu0 %v1941
    %v2748 = vpop.f32.mrf.mxu0
    %v2749 = vadd.f32 %v2652, %v2748
    %v2750 = vpop.f32.mrf.mxu0
    %v2751 = vpop.f32.mrf.mxu0
    %v2752 = vadd.f32 %v2655, %v2751
    %v2753 = vpop.f32.mrf.mxu0
    %2754 = vmatprep.mubr.bf16.mxu0 %v1950
    %2755 = vmatmul.mubr.bf16.gmra.mxu0 %v1949
    %v2756 = vpop.f32.mrf.mxu0
    %v2757 = vadd.f32 %v2660, %v2756
    %v2758 = vpop.f32.mrf.mxu0
    %v2759 = vpop.f32.mrf.mxu0
    %v2760 = vadd.f32 %v2663, %v2759
    %v2761 = vpop.f32.mrf.mxu0
    %2762 = vmatprep.mubr.bf16.mxu0 %v1958
    %2763 = vmatmul.mubr.bf16.gmra.mxu0 %v1957
    %v2764 = vpop.f32.mrf.mxu0
    %v2765 = vadd.f32 %v2668, %v2764
    %v2766 = vpop.f32.mrf.mxu0
    %v2767 = vpop.f32.mrf.mxu0
    %v2768 = vadd.f32 %v2671, %v2767
    %v2769 = vpop.f32.mrf.mxu0
    %2770 = vmatprep.mubr.bf16.mxu0 %v1966
    %2771 = vmatmul.mubr.bf16.gmra.mxu0 %v1965
    %v2772 = vpop.f32.mrf.mxu0
    %v2773 = vadd.f32 %v2676, %v2772
    %v2774 = vpop.f32.mrf.mxu0
    %v2775 = vpop.f32.mrf.mxu0
    %v2776 = vadd.f32 %v2679, %v2775
    %v2777 = vpop.f32.mrf.mxu0
    %2778 = vmatprep.mubr.bf16.mxu0 %v1974
    %2779 = vmatmul.mubr.bf16.gmra.mxu0 %v1973
    %v2780 = vpop.f32.mrf.mxu0
    %v2781 = vadd.f32 %v2684, %v2780
    %v2782 = vpop.f32.mrf.mxu0
    %v2783 = vpop.f32.mrf.mxu0
    %v2784 = vadd.f32 %v2687, %v2783
    %v2785 = vpop.f32.mrf.mxu0
    %2786 = vmatprep.mubr.bf16.mxu0 %v1982
    %2787 = vmatmul.mubr.bf16.gmra.mxu0 %v1981
    %v2788 = vpop.f32.mrf.mxu0
    %v2789 = vadd.f32 %v2692, %v2788
    %v2790 = vpop.f32.mrf.mxu0
    %v2791 = vpop.f32.mrf.mxu0
    %v2792 = vadd.f32 %v2695, %v2791
    %v2793 = vpop.f32.mrf.mxu0
    %2794 = vmatprep.mubr.bf16.mxu0 %v1990
    %2795 = vmatmul.mubr.bf16.gmra.mxu0 %v1989
    %v2796 = vpop.f32.mrf.mxu0
    %v2797 = vadd.f32 %v2700, %v2796
    %v2798 = vpop.f32.mrf.mxu0
    %v2799 = vpop.f32.mrf.mxu0
    %v2800 = vadd.f32 %v2703, %v2799
    %v2801 = vpop.f32.mrf.mxu0
    %2802 = vmatprep.mubr.bf16.mxu0 %v1998
    %2803 = vmatmul.mubr.bf16.gmra.mxu0 %v1997
    %v2804 = vpop.f32.mrf.mxu0
    %v2805 = vadd.f32 %v2708, %v2804
    %v2806 = vpop.f32.mrf.mxu0
    %v2807 = vpop.f32.mrf.mxu0
    %v2808 = vadd.f32 %v2711, %v2807
    %v2809 = vpop.f32.mrf.mxu0
    %2810 = vdwg.mxu0
    %2811 = vmatprep.subr.bf16.mxu0 0
    %2812 = vmatpush1.bf16.msra.mxu0 %v2447
    %2813 = vmatprep.subr.bf16.mxu0 0
    %2814 = vmatpush1.bf16.msra.mxu0 %v2446
    %2815 = vmatprep.subr.bf16.mxu0 0
    %2816 = vmatpush1.bf16.msra.mxu0 %v2445
    %2817 = vmatprep.subr.bf16.mxu0 0
    %2818 = vmatpush1.bf16.msra.mxu0 %v2444
    %2819 = vmatprep.subr.bf16.mxu0 0
    %2820 = vmatpush1.bf16.msra.mxu0 %v2443
    %2821 = vmatprep.subr.bf16.mxu0 0
    %2822 = vmatpush1.bf16.msra.mxu0 %v2442
    %2823 = vmatprep.subr.bf16.mxu0 0
    %2824 = vmatpush1.bf16.msra.mxu0 %v2441
    %2825 = vmatprep.subr.bf16.mxu0 0
    %2826 = vmatpush1.bf16.msra.mxu0 %v2440
    %2827 = vmatprep.subr.bf16.mxu0 0
    %2828 = vmatpush2.bf16.msra.mxu0 %v2455
    %2829 = vmatprep.subr.bf16.mxu0 0
    %2830 = vmatpush2.bf16.msra.mxu0 %v2454
    %2831 = vmatprep.subr.bf16.mxu0 0
    %2832 = vmatpush2.bf16.msra.mxu0 %v2453
    %2833 = vmatprep.subr.bf16.mxu0 0
    %2834 = vmatpush2.bf16.msra.mxu0 %v2452
    %2835 = vmatprep.subr.bf16.mxu0 0
    %2836 = vmatpush2.bf16.msra.mxu0 %v2451
    %2837 = vmatprep.subr.bf16.mxu0 0
    %2838 = vmatpush2.bf16.msra.mxu0 %v2450
    %2839 = vmatprep.subr.bf16.mxu0 0
    %2840 = vmatpush2.bf16.msra.mxu0 %v2449
    %2841 = vmatprep.subr.bf16.mxu0 0
    %2842 = vmatpush2.bf16.msra.mxu0 %v2448
    %2843 = vmatprep.mubr.bf16.mxu0 %v1944
    %2844 = vmatmul.mubr.bf16.gmra.mxu0 %v1943
    %v2845 = vpop.f32.mrf.mxu0
    %v2846 = vadd.f32 %v2749, %v2845
    %v2847 = vpop.f32.mrf.mxu0
    %v2848 = vpop.f32.mrf.mxu0
    %v2849 = vadd.f32 %v2752, %v2848
    %v2850 = vpop.f32.mrf.mxu0
    %2851 = vmatprep.mubr.bf16.mxu0 %v1952
    %2852 = vmatmul.mubr.bf16.gmra.mxu0 %v1951
    %v2853 = vpop.f32.mrf.mxu0
    %v2854 = vadd.f32 %v2757, %v2853
    %v2855 = vpop.f32.mrf.mxu0
    %v2856 = vpop.f32.mrf.mxu0
    %v2857 = vadd.f32 %v2760, %v2856
    %v2858 = vpop.f32.mrf.mxu0
    %2859 = vmatprep.mubr.bf16.mxu0 %v1960
    %2860 = vmatmul.mubr.bf16.gmra.mxu0 %v1959
    %v2861 = vpop.f32.mrf.mxu0
    %v2862 = vadd.f32 %v2765, %v2861
    %v2863 = vpop.f32.mrf.mxu0
    %v2864 = vpop.f32.mrf.mxu0
    %v2865 = vadd.f32 %v2768, %v2864
    %v2866 = vpop.f32.mrf.mxu0
    %2867 = vmatprep.mubr.bf16.mxu0 %v1968
    %2868 = vmatmul.mubr.bf16.gmra.mxu0 %v1967
    %v2869 = vpop.f32.mrf.mxu0
    %v2870 = vadd.f32 %v2773, %v2869
    %v2871 = vpop.f32.mrf.mxu0
    %v2872 = vpop.f32.mrf.mxu0
    %v2873 = vadd.f32 %v2776, %v2872
    %v2874 = vpop.f32.mrf.mxu0
    %2875 = vmatprep.mubr.bf16.mxu0 %v1976
    %2876 = vmatmul.mubr.bf16.gmra.mxu0 %v1975
    %v2877 = vpop.f32.mrf.mxu0
    %v2878 = vadd.f32 %v2781, %v2877
    %v2879 = vpop.f32.mrf.mxu0
    %v2880 = vpop.f32.mrf.mxu0
    %v2881 = vadd.f32 %v2784, %v2880
    %v2882 = vpop.f32.mrf.mxu0
    %2883 = vmatprep.mubr.bf16.mxu0 %v1984
    %2884 = vmatmul.mubr.bf16.gmra.mxu0 %v1983
    %v2885 = vpop.f32.mrf.mxu0
    %v2886 = vadd.f32 %v2789, %v2885
    %v2887 = vpop.f32.mrf.mxu0
    %v2888 = vpop.f32.mrf.mxu0
    %v2889 = vadd.f32 %v2792, %v2888
    %v2890 = vpop.f32.mrf.mxu0
    %2891 = vmatprep.mubr.bf16.mxu0 %v1992
    %2892 = vmatmul.mubr.bf16.gmra.mxu0 %v1991
    %v2893 = vpop.f32.mrf.mxu0
    %v2894 = vadd.f32 %v2797, %v2893
    %v2895 = vpop.f32.mrf.mxu0
    %v2896 = vpop.f32.mrf.mxu0
    %v2897 = vadd.f32 %v2800, %v2896
    %v2898 = vpop.f32.mrf.mxu0
    %2899 = vmatprep.mubr.bf16.mxu0 %v2000
    %2900 = vmatmul.mubr.bf16.gmra.mxu0 %v1999
    %v2901 = vpop.f32.mrf.mxu0
    %v2902 = vadd.f32 %v2805, %v2901
    %v2903 = vpop.f32.mrf.mxu0
    %v2904 = vpop.f32.mrf.mxu0
    %v2905 = vadd.f32 %v2808, %v2904
    %v2906 = vpop.f32.mrf.mxu0
    %2907 = vdwg.mxu0
    %v2908 = vmul.f32 %v2846, 0.5
    %v2909 = vmul.f32 %v2849, 0.5
    %v2910 = vmul.f32 %v2854, 0.5
    %v2911 = vmul.f32 %v2857, 0.5
    %v2912 = vmul.f32 %v2862, 0.5
    %v2913 = vmul.f32 %v2865, 0.5
    %v2914 = vmul.f32 %v2870, 0.5
    %v2915 = vmul.f32 %v2873, 0.5
    %v2916 = vmul.f32 %v2878, 0.5
    %v2917 = vmul.f32 %v2881, 0.5
    %v2918 = vmul.f32 %v2886, 0.5
    %v2919 = vmul.f32 %v2889, 0.5
    %v2920 = vmul.f32 %v2894, 0.5
    %v2921 = vmul.f32 %v2897, 0.5
    %v2922 = vmul.f32 %v2902, 0.5
    %v2923 = vmul.f32 %v2905, 0.5
    %v2924 = vmul.f32 %v2846, 0.044715
    %v2925 = vmul.f32 %v2849, 0.044715
    %v2926 = vmul.f32 %v2854, 0.044715
    %v2927 = vmul.f32 %v2857, 0.044715
    %v2928 = vmul.f32 %v2862, 0.044715
    %v2929 = vmul.f32 %v2865, 0.044715
    %v2930 = vmul.f32 %v2870, 0.044715
    %v2931 = vmul.f32 %v2873, 0.044715
    %v2932 = vmul.f32 %v2878, 0.044715
    %v2933 = vmul.f32 %v2881, 0.044715
    %v2934 = vmul.f32 %v2886, 0.044715
    %v2935 = vmul.f32 %v2889, 0.044715
    %v2936 = vmul.f32 %v2894, 0.044715
    %v2937 = vmul.f32 %v2897, 0.044715
    %v2938 = vmul.f32 %v2902, 0.044715
    %v2939 = vmul.f32 %v2905, 0.044715
    %v2940 = vmul.f32 %v2924, %v2846
    %v2941 = vmul.f32 %v2925, %v2849
    %v2942 = vmul.f32 %v2926, %v2854
    %v2943 = vmul.f32 %v2927, %v2857
    %v2944 = vmul.f32 %v2928, %v2862
    %v2945 = vmul.f32 %v2929, %v2865
    %v2946 = vmul.f32 %v2930, %v2870
    %v2947 = vmul.f32 %v2931, %v2873
    %v2948 = vmul.f32 %v2932, %v2878
    %v2949 = vmul.f32 %v2933, %v2881
    %v2950 = vmul.f32 %v2934, %v2886
    %v2951 = vmul.f32 %v2935, %v2889
    %v2952 = vmul.f32 %v2936, %v2894
    %v2953 = vmul.f32 %v2937, %v2897
    %v2954 = vmul.f32 %v2938, %v2902
    %v2955 = vmul.f32 %v2939, %v2905
    %v2956 = vmul.f32 %v2940, %v2846
    %v2957 = vmul.f32 %v2941, %v2849
    %v2958 = vmul.f32 %v2942, %v2854
    %v2959 = vmul.f32 %v2943, %v2857
    %v2960 = vmul.f32 %v2944, %v2862
    %v2961 = vmul.f32 %v2945, %v2865
    %v2962 = vmul.f32 %v2946, %v2870
    %v2963 = vmul.f32 %v2947, %v2873
    %v2964 = vmul.f32 %v2948, %v2878
    %v2965 = vmul.f32 %v2949, %v2881
    %v2966 = vmul.f32 %v2950, %v2886
    %v2967 = vmul.f32 %v2951, %v2889
    %v2968 = vmul.f32 %v2952, %v2894
    %v2969 = vmul.f32 %v2953, %v2897
    %v2970 = vmul.f32 %v2954, %v2902
    %v2971 = vmul.f32 %v2955, %v2905
    %v2972 = vadd.f32 %v2846, %v2956
    %v2973 = vadd.f32 %v2849, %v2957
    %v2974 = vadd.f32 %v2854, %v2958
    %v2975 = vadd.f32 %v2857, %v2959
    %v2976 = vadd.f32 %v2862, %v2960
    %v2977 = vadd.f32 %v2865, %v2961
    %v2978 = vadd.f32 %v2870, %v2962
    %v2979 = vadd.f32 %v2873, %v2963
    %v2980 = vadd.f32 %v2878, %v2964
    %v2981 = vadd.f32 %v2881, %v2965
    %v2982 = vadd.f32 %v2886, %v2966
    %v2983 = vadd.f32 %v2889, %v2967
    %v2984 = vadd.f32 %v2894, %v2968
    %v2985 = vadd.f32 %v2897, %v2969
    %v2986 = vadd.f32 %v2902, %v2970
    %v2987 = vadd.f32 %v2905, %v2971
    %v2988 = vmul.f32 %v2972, 0.7978846
    %v2989 = vmul.f32 %v2973, 0.7978846
    %v2990 = vmul.f32 %v2974, 0.7978846
    %v2991 = vmul.f32 %v2975, 0.7978846
    %v2992 = vmul.f32 %v2976, 0.7978846
    %v2993 = vmul.f32 %v2977, 0.7978846
    %v2994 = vmul.f32 %v2978, 0.7978846
    %v2995 = vmul.f32 %v2979, 0.7978846
    %v2996 = vmul.f32 %v2980, 0.7978846
    %v2997 = vmul.f32 %v2981, 0.7978846
    %v2998 = vmul.f32 %v2982, 0.7978846
    %v2999 = vmul.f32 %v2983, 0.7978846
    %v3000 = vmul.f32 %v2984, 0.7978846
    %v3001 = vmul.f32 %v2985, 0.7978846
    %v3002 = vmul.f32 %v2986, 0.7978846
    %v3003 = vmul.f32 %v2987, 0.7978846
    %v3004 = vtanh.pop %v2988
    %v3005 = vtanh.pop %v2989
    %v3006 = vtanh.pop %v2990
    %v3007 = vtanh.pop %v2991
    %v3008 = vtanh.pop %v2992
    %v3009 = vtanh.pop %v2993
    %v3010 = vtanh.pop %v2994
    %v3011 = vtanh.pop %v2995
    %v3012 = vtanh.pop %v2996
    %v3013 = vtanh.pop %v2997
    %v3014 = vtanh.pop %v2998
    %v3015 = vtanh.pop %v2999
    %v3016 = vtanh.pop %v3000
    %v3017 = vtanh.pop %v3001
    %v3018 = vtanh.pop %v3002
    %v3019 = vtanh.pop %v3003
    %v3020 = vadd.f32 %v3004, 1.0
    %v3021 = vadd.f32 %v3005, 1.0
    %v3022 = vadd.f32 %v3006, 1.0
    %v3023 = vadd.f32 %v3007, 1.0
    %v3024 = vadd.f32 %v3008, 1.0
    %v3025 = vadd.f32 %v3009, 1.0
    %v3026 = vadd.f32 %v3010, 1.0
    %v3027 = vadd.f32 %v3011, 1.0
    %v3028 = vadd.f32 %v3012, 1.0
    %v3029 = vadd.f32 %v3013, 1.0
    %v3030 = vadd.f32 %v3014, 1.0
    %v3031 = vadd.f32 %v3015, 1.0
    %v3032 = vadd.f32 %v3016, 1.0
    %v3033 = vadd.f32 %v3017, 1.0
    %v3034 = vadd.f32 %v3018, 1.0
    %v3035 = vadd.f32 %v3019, 1.0
    %v3036 = vmul.f32 %v2908, %v3020
    %v3037 = vmul.f32 %v2909, %v3021
    %v3038 = vmul.f32 %v2910, %v3022
    %v3039 = vmul.f32 %v2911, %v3023
    %v3040 = vmul.f32 %v2912, %v3024
    %v3041 = vmul.f32 %v2913, %v3025
    %v3042 = vmul.f32 %v2914, %v3026
    %v3043 = vmul.f32 %v2915, %v3027
    %v3044 = vmul.f32 %v2916, %v3028
    %v3045 = vmul.f32 %v2917, %v3029
    %v3046 = vmul.f32 %v2918, %v3030
    %v3047 = vmul.f32 %v2919, %v3031
    %v3048 = vmul.f32 %v2920, %v3032
    %v3049 = vmul.f32 %v2921, %v3033
    %v3050 = vmul.f32 %v2922, %v3034
    %v3051 = vmul.f32 %v2923, %v3035
    %3052 = vst [vmem:[#allocation7] sm:$0xff] %v3036
    %3053 = vst [vmem:[#allocation7 + $0x8] sm:$0xff] %v3037
    %3054 = vst [vmem:[#allocation7 + $0x10] sm:$0xff] %v3038
    %3055 = vst [vmem:[#allocation7 + $0x18] sm:$0xff] %v3039
    %3056 = vst [vmem:[#allocation7 + $0x20] sm:$0xff] %v3040
    %3057 = vst [vmem:[#allocation7 + $0x28] sm:$0xff] %v3041
    %3058 = vst [vmem:[#allocation7 + $0x30] sm:$0xff] %v3042
    %3059 = vst [vmem:[#allocation7 + $0x38] sm:$0xff] %v3043
    %3060 = vst [vmem:[#allocation7 + $0x40] sm:$0xff] %v3044
    %3061 = vst [vmem:[#allocation7 + $0x48] sm:$0xff] %v3045
    %3062 = vst [vmem:[#allocation7 + $0x50] sm:$0xff] %v3046
    %3063 = vst [vmem:[#allocation7 + $0x58] sm:$0xff] %v3047
    %3064 = vst [vmem:[#allocation7 + $0x60] sm:$0xff] %v3048
    %3065 = vst [vmem:[#allocation7 + $0x68] sm:$0xff] %v3049
    %3066 = vst [vmem:[#allocation7 + $0x70] sm:$0xff] %v3050
    %3067 = vst [vmem:[#allocation7 + $0x78] sm:$0xff] %v3051
    // Predicated region
    $region30: #{tpu_custom_call.1} parent=1 // pred_check
      _
    $region31: #{tpu_custom_call.1} parent=1 // pred_check_branch
      %3069 = sbr.rel (0) target = $region33
    $region32: #{tpu_custom_call.1} parent=1 // pred_region
      %s3071 = ssub.s32 2048, 2048
      %3072 = vsyncadd [#allocation4], %s3071
      %s3073 = sshll.u32 [#allocation7], 4
      %s3074 = int_to_ptr.vmem [resolvable:$true] %s3073
      %3079 = dma.vmem_to_hbm [thread:$0]  %s3074, 2048, %s5, [#allocation4], 128, 128, 8
    $region33: #{tpu_custom_call.1} parent=1 // pred_fallthru
      _
    // Predicated region
    $region34: #{tpu_custom_call.1} parent=1 // pred_check
      _
    $region35: #{tpu_custom_call.1} parent=1 // pred_check_branch
      %3081 = sbr.rel (0) target = $region37
    $region36: #{tpu_custom_call.1} parent=1 // pred_region
      %3082 = dma.done [#allocation4], 2048
    $region37: #{tpu_custom_call.1} parent=1 // pred_fallthru
      _
    %3083 = vsyncpa [#allocation3], 1
    %3084 = vsyncpa [#allocation6], 1
    %3085 = vsyncpa [#allocation4], 1

</llo_original>
